<compile_context>
chip_gen: v7x
topology: tpu7x:2x2x1
jax: 0.10.0
libtpu: 0.0.40
codegen_flags: <defaults>
</compile_context>

<pallas_src>
import functools

import numpy as np
import jax
import jax.numpy as jnp
from jax import lax
from jax.experimental import pallas as pl
from jax.experimental.pallas import tpu as pltpu


def _round_up(v, m):
    return (v + m - 1) // m * m


def _dot_f32_3pass(a, b):
    """f32 matmul as 3 bf16 MXU passes with f32 accumulation (~Precision.HIGH)."""
    a_hi = a.astype(jnp.bfloat16)
    a_lo = (a - a_hi.astype(jnp.float32)).astype(jnp.bfloat16)
    b_hi = b.astype(jnp.bfloat16)
    b_lo = (b - b_hi.astype(jnp.float32)).astype(jnp.bfloat16)
    out = jnp.dot(a_hi, b_hi, preferred_element_type=jnp.float32)
    out = out + jnp.dot(a_lo, b_hi, preferred_element_type=jnp.float32)
    out = out + jnp.dot(a_hi, b_lo, preferred_element_type=jnp.float32)
    return out


def _resblock_kernel(x_ref, cidx_ref, w1_ref, b1_ref, w2_ref, b2_ref,
                     wa_ref, ba_ref, out_ref,
                     xr_ref, mid_ref, p1_ref, p2_ref,
                     *, K, H, W, NB, Cin, Cout, Cp_in, Cp_mid, use_adapt):
    """Fused ResBlock for NB batch elements, lane-dense flattened layout.

    x_ref   : (NB, Cin, H*W)        unpadded input chunk
    cidx_ref: (1, H*W) int32        column index (p % W) for border masks
    w1_ref  : (Cp_mid, K*K*Cp_in)   conv1 weight, cols (kh, kw, ci), zero-padded
    b1_ref  : (Cp_mid, 1)
    w2_ref  : (Cout, K*K*Cp_mid)    conv2 weight
    b2_ref  : (Cout, 1)
    wa_ref  : (Cout, Cin)           1x1 adapt weight (zeros if !use_adapt)
    ba_ref  : (Cout, 1)
    out_ref : (Cout, NB*H*W)        lane-dense output slab
    xr_ref  : (Cp_in, NB*L)         scratch: relu(x) with zero halo per element
    mid_ref : (Cp_mid, NB*L)        scratch: relu(conv1(...)) with zero halo
    p1_ref  : (K*K*Cp_in, NB*HW)    scratch: conv1 im2col patch matrix
    p2_ref  : (K*K*Cp_mid, NB*HW)   scratch: conv2 im2col patch matrix
    """
    pad = K // 2
    HW = H * W
    L = (H + 2 * pad) * W + 2 * pad          # per-element padded flat length
    in_off = pad * (W + 1)                   # flat offset of image pixel (0, 0)
    taps = [(kh, kw) for kh in range(-pad, pad + 1)
            for kw in range(-pad, pad + 1)]

    # Horizontal-border masks, one per kw != 0.  Vertical borders and the flat
    # end padding read the zero halo in the staging buffers.
    jj = cidx_ref[...]                       # (1, HW) int32, = p % W
    col_mask = {kw: (jj + kw >= 0) & (jj + kw < W)
                for kw in range(-pad, pad + 1) if kw != 0}

    # relu(x) staged ONCE into a zero-halo, sublane-padded buffer.  Re-zeroed
    # every step on purpose: scratch persists per-core across grid iterations.
    xr_ref[...] = jnp.zeros_like(xr_ref)
    for b in range(NB):
        beg = b * L + in_off
        xr_ref[0:Cin, beg:beg + HW] = jnp.maximum(x_ref[b], 0.0)

    def gather_patches(src_ref, cp, dst_ref):
        # One slice per (tap, batch element); every destination store starts on
        # an (8,128) tile boundary (cp multiple of 8, HW multiple of 128).
        for t, (kh, kw) in enumerate(taps):
            off = in_off + kh * W + kw
            for b in range(NB):
                patch = src_ref[:, b * L + off:b * L + off + HW]   # (cp, HW)
                if kw != 0:
                    patch = jnp.where(col_mask[kw], patch, 0.0)
                dst_ref[t * cp:(t + 1) * cp, b * HW:(b + 1) * HW] = patch

    # ---- conv1 (im2col + one batched MXU dot) + relu2 ------------------------
    gather_patches(xr_ref, Cp_in, p1_ref)
    mid = _dot_f32_3pass(w1_ref[...], p1_ref[...]) + b1_ref[...]
    mid = jnp.maximum(mid, 0.0)              # (Cp_mid, NB*HW); padded rows stay 0

    # Stage into the padded buffer; zero only the halos (interior overwritten).
    for b in range(NB):
        base = b * L
        mid_ref[:, base:base + in_off] = jnp.zeros((Cp_mid, in_off), jnp.float32)
        mid_ref[:, base + in_off + HW:base + L] = jnp.zeros(
            (Cp_mid, L - in_off - HW), jnp.float32)
        mid_ref[:, base + in_off:base + in_off + HW] = mid[:, b * HW:(b + 1) * HW]

    # ---- conv2 ---------------------------------------------------------------
    gather_patches(mid_ref, Cp_mid, p2_ref)
    y = _dot_f32_3pass(w2_ref[...], p2_ref[...]) + b2_ref[...]   # (Cout, NB*HW)

    # ---- residual (per batch element; 128-multiple lane-aligned stores) -------
    for b in range(NB):
        xb = x_ref[b]                        # (Cin, HW), original un-relu'd x
        if use_adapt:
            res = _dot_f32_3pass(wa_ref[...], xb) + ba_ref[...]
        else:
            res = xb                         # Cin == Cout here
        out_ref[:, b * HW:(b + 1) * HW] = y[:, b * HW:(b + 1) * HW] + res


def prepare_resblock_params(params, *, kernel_size, use_adapt):
    """One-time preprocessing of torch-layout (OIHW) params into MXU matrices."""
    w1, b1, w2, b2, wa, ba = params
    K = kernel_size
    Cmid, Cin = int(w1.shape[0]), int(w1.shape[1])
    Cout = int(w2.shape[0])
    Cp_in = _round_up(Cin, 8)
    Cp_mid = _round_up(Cmid, 8)

    # Columns ordered (kh, kw, ci) with the per-tap channel block zero-padded
    # to Cp_* so it matches the sublane-aligned im2col patch rows.
    w1t = jnp.pad(jnp.transpose(w1, (0, 2, 3, 1)),
                  ((0, Cp_mid - Cmid), (0, 0), (0, 0), (0, Cp_in - Cin)))
    w1m = w1t.reshape(Cp_mid, K * K * Cp_in)
    b1c = jnp.pad(b1, (0, Cp_mid - Cmid)).reshape(Cp_mid, 1)

    w2t = jnp.pad(jnp.transpose(w2, (0, 2, 3, 1)),
                  ((0, 0), (0, 0), (0, 0), (0, Cp_mid - Cmid)))
    w2m = w2t.reshape(Cout, K * K * Cp_mid)
    b2c = b2.reshape(Cout, 1)

    if use_adapt:
        wam = wa.reshape(Cout, Cin)
        bac = ba.reshape(Cout, 1)
    else:
        wam = jnp.zeros((Cout, Cin), jnp.float32)
        bac = jnp.zeros((Cout, 1), jnp.float32)

    cfg = dict(K=K, Cin=Cin, Cmid=Cmid, Cout=Cout, Cp_in=Cp_in, Cp_mid=Cp_mid,
               use_adapt=use_adapt)
    return (w1m, b1c, w2m, b2c, wam, bac), cfg


def _pick_batch_chunk(N, HW, L, cfg, budget_bytes=48 << 20):
    """Largest divisor of N whose per-step VMEM footprint fits the budget
    (sized for v7x's 64 MiB physical VMEM with headroom)."""
    K, Cp_in, Cp_mid = cfg["K"], cfg["Cp_in"], cfg["Cp_mid"]
    Cin, Cout = cfg["Cin"], cfg["Cout"]
    nb = 1
    for cand in range(1, N + 1):
        if N % cand:
            continue
        scratch = 4 * cand * ((Cp_in + Cp_mid) * L
                              + K * K * (Cp_in + Cp_mid) * HW)
        io = 2 * 4 * cand * (Cin + Cout) * HW      # double-buffered in/out blocks
        if scratch + io <= budget_bytes:
            nb = cand
    return nb


def resblock_forward(x_nchw, prepared):
    """x_nchw: (N, Cin, H, W) float32, PyTorch layout. Returns (N, Cout, H, W)."""
    (w1m, b1c, w2m, b2c, wam, bac), cfg = prepared
    N, Cin, H, W = x_nchw.shape
    assert Cin == cfg["Cin"]
    K, Cout = cfg["K"], cfg["Cout"]
    Cp_in, Cp_mid = cfg["Cp_in"], cfg["Cp_mid"]
    pad = K // 2
    HW = H * W
    L = (H + 2 * pad) * W + 2 * pad

    NB = _pick_batch_chunk(N, HW, L, cfg)
    xflat = x_nchw.reshape(N, Cin, HW)       # metadata reshape only, no pad copy

    # Column index p % W (compile-time constant; no vector int div in-kernel).
    col_idx = jnp.asarray((np.arange(HW, dtype=np.int32) % W).reshape(1, HW))

    kernel = functools.partial(
        _resblock_kernel, K=K, H=H, W=W, NB=NB, Cin=Cin, Cout=Cout,
        Cp_in=Cp_in, Cp_mid=Cp_mid, use_adapt=cfg["use_adapt"])

    def full(shape):                         # whole-array block, same every step
        return pl.BlockSpec(shape, lambda n, _r=len(shape): (0,) * _r)

    out_flat = pl.pallas_call(
        kernel,
        out_shape=jax.ShapeDtypeStruct((Cout, N * HW), jnp.float32),
        grid_spec=pltpu.PrefetchScalarGridSpec(
            num_scalar_prefetch=0,
            grid=(N // NB,),
            in_specs=[
                pl.BlockSpec((NB, Cin, HW), lambda n: (n, 0, 0)),   # x chunk
                full((1, HW)),                                      # col index
                full((Cp_mid, K * K * Cp_in)),                      # w1
                full((Cp_mid, 1)),                                  # b1
                full((Cout, K * K * Cp_mid)),                       # w2
                full((Cout, 1)),                                    # b2
                full((Cout, Cin)),                                  # wa
                full((Cout, 1)),                                    # ba
            ],
            out_specs=pl.BlockSpec((Cout, NB * HW), lambda n: (0, n)),
            scratch_shapes=[
                pltpu.VMEM((Cp_in, NB * L), jnp.float32),            # relu(x)
                pltpu.VMEM((Cp_mid, NB * L), jnp.float32),           # mid act.
                pltpu.VMEM((K * K * Cp_in, NB * HW), jnp.float32),   # conv1 patches
                pltpu.VMEM((K * K * Cp_mid, NB * HW), jnp.float32),  # conv2 patches
            ],
        ),
        compiler_params=pltpu.CompilerParams(
            dimension_semantics=("parallel",)),      # batch-chunk axis (v7x: 2 TCs)
    )(xflat, col_idx, w1m, b1c, w2m, b2c, wam, bac)

    # Lane-dense (Cout, N*HW) slab -> (N, Cout, H, W): layout plumbing only.
    return out_flat.reshape(Cout, N, H, W).transpose(1, 0, 2, 3)


# ---------------------------- pure-JAX reference -----------------------------
def resblock_reference(x, params, *, kernel_size, use_adapt):
    w1, b1, w2, b2, wa, ba = params
    pad = kernel_size // 2
    dn = ('NCHW', 'OIHW', 'NCHW')

    def conv(inp, w, b, p):
        y = lax.conv_general_dilated(
            inp, w, (1, 1), [(p, p), (p, p)], dimension_numbers=dn,
            precision=lax.Precision.HIGHEST)
        return y + b.reshape(1, -1, 1, 1)

    x1 = jnp.maximum(x, 0.0)                     # relu1
    y = jnp.maximum(conv(x1, w1, b1, pad), 0.0)  # conv1 + relu2
    y = conv(y, w2, b2, pad)                     # conv2
    if use_adapt:
        return conv(x, wa, ba, 0) + y
    return x + y


# ------------------------------ parameter init --------------------------------
def _xavier_conv(key, cout, cin, k):
    """torch.nn.init.xavier_uniform_ for a (cout, cin, k, k) conv weight."""
    fan_in = cin * k * k
    fan_out = cout * k * k
    bound = (6.0 / (fan_in + fan_out)) ** 0.5
    return jax.random.uniform(key, (cout, cin, k, k), jnp.float32, -bound, bound)


def make_resblock_params(key, inputchannel, outputchannel, kernel_size):
    k1, k2, k3 = jax.random.split(key, 3)
    w1 = _xavier_conv(k1, outputchannel, inputchannel, kernel_size)
    b1 = jnp.zeros((outputchannel,), jnp.float32)
    w2 = _xavier_conv(k2, outputchannel, outputchannel, kernel_size)
    b2 = jnp.zeros((outputchannel,), jnp.float32)
    if inputchannel != outputchannel:
        wa = _xavier_conv(k3, outputchannel, inputchannel, 1)
        ba = jnp.zeros((outputchannel,), jnp.float32)
        use_adapt = True
    else:
        wa, ba, use_adapt = None, None, False
    return (w1, b1, w2, b2, wa, ba), use_adapt


# ------------------------------------ main ------------------------------------
if __name__ == "__main__":
    key = jax.random.PRNGKey(0)
    kx, kp1, kp2 = jax.random.split(key, 3)

    N, Cin, H, W = 2, 4, 16, 16
    K = 3
    x = jax.random.normal(kx, (N, Cin, H, W), jnp.float32)

    # Case 1: inputchannel == outputchannel (adapt_conv is None, x + conv path)
    params1, adapt1 = make_resblock_params(kp1, Cin, Cin, K)
    prep1 = prepare_resblock_params(params1, kernel_size=K, use_adapt=adapt1)
    out1 = jax.block_until_ready(resblock_forward(x, prep1))
    ref1 = resblock_reference(x, params1, kernel_size=K, use_adapt=adapt1)
    assert out1.shape == (N, Cin, H, W)
    assert jnp.allclose(out1, ref1, atol=1e-4, rtol=1e-4), "mismatch (no adapt)"

    # Case 2: inputchannel != outputchannel (adapt_conv 1x1 on the residual)
    Cout2 = 8
    params2, adapt2 = make_resblock_params(kp2, Cin, Cout2, K)
    prep2 = prepare_resblock_params(params2, kernel_size=K, use_adapt=adapt2)
    out2 = jax.block_until_ready(resblock_forward(x, prep2))
    ref2 = resblock_reference(x, params2, kernel_size=K, use_adapt=adapt2)
    assert out2.shape == (N, Cout2, H, W)
    assert jnp.allclose(out2, ref2, atol=1e-4, rtol=1e-4), "mismatch (adapt)"

    print("KERNEL_OK")
</pallas_src>

<mosaic_0001>
module attributes {stable_mosaic.version = 11 : i64} {
  func.func @_resblock_kernel(%arg0: i32, %arg1: memref<2x4x256xf32, #tpu.memory_space<vmem>>, %arg2: memref<1x256xi32, #tpu.memory_space<vmem>>, %arg3: memref<8x72xf32, #tpu.memory_space<vmem>>, %arg4: memref<8x1xf32, #tpu.memory_space<vmem>>, %arg5: memref<4x72xf32, #tpu.memory_space<vmem>>, %arg6: memref<4x1xf32, #tpu.memory_space<vmem>>, %arg7: memref<4x4xf32, #tpu.memory_space<vmem>>, %arg8: memref<4x1xf32, #tpu.memory_space<vmem>>, %arg9: memref<4x512xf32, #tpu.memory_space<vmem>>, %arg10: memref<8x580xf32, #tpu.memory_space<vmem>>, %arg11: memref<8x580xf32, #tpu.memory_space<vmem>>, %arg12: memref<72x512xf32, #tpu.memory_space<vmem>>, %arg13: memref<72x512xf32, #tpu.memory_space<vmem>>) attributes {dimension_semantics = [#tpu.dimension_semantics<parallel>], iteration_bounds = array<i64: 1>, scalar_prefetch = 0 : i64, scratch_operands = 4 : i64, tpu.core_type = #tpu.core_type<tc>, window_params = [{transform_indices = @transform_0, window_bounds = array<i64: 2, 4, 256>}, {pipeline_mode = #tpu.pipeline_mode<synchronous>, transform_indices = @transform_1, window_bounds = array<i64: 1, 256>}, {pipeline_mode = #tpu.pipeline_mode<synchronous>, transform_indices = @transform_2, window_bounds = array<i64: 8, 72>}, {pipeline_mode = #tpu.pipeline_mode<synchronous>, transform_indices = @transform_3, window_bounds = array<i64: 8, 1>}, {pipeline_mode = #tpu.pipeline_mode<synchronous>, transform_indices = @transform_4, window_bounds = array<i64: 4, 72>}, {pipeline_mode = #tpu.pipeline_mode<synchronous>, transform_indices = @transform_5, window_bounds = array<i64: 4, 1>}, {pipeline_mode = #tpu.pipeline_mode<synchronous>, transform_indices = @transform_6, window_bounds = array<i64: 4, 4>}, {pipeline_mode = #tpu.pipeline_mode<synchronous>, transform_indices = @transform_7, window_bounds = array<i64: 4, 1>}, {transform_indices = @transform_8, window_bounds = array<i64: 4, 512>}]} {
    %c0 = arith.constant 0 : index
    %c0_0 = arith.constant 0 : index
    %0 = vector.load %arg2[%c0, %c0_0] : memref<1x256xi32, #tpu.memory_space<vmem>>, vector<1x256xi32>
    %c-1_i32 = arith.constant -1 : i32
    %1 = vector.broadcast %c-1_i32 : i32 to vector<1x256xi32>
    %2 = arith.addi %0, %1 : vector<1x256xi32>
    %c0_i32 = arith.constant 0 : i32
    %3 = vector.broadcast %c0_i32 : i32 to vector<1x256xi32>
    %4 = arith.cmpi sge, %2, %3 : vector<1x256xi32>
    %c-1_i32_1 = arith.constant -1 : i32
    %5 = vector.broadcast %c-1_i32_1 : i32 to vector<1x256xi32>
    %6 = arith.addi %0, %5 : vector<1x256xi32>
    %c16_i32 = arith.constant 16 : i32
    %7 = vector.broadcast %c16_i32 : i32 to vector<1x256xi32>
    %8 = arith.cmpi slt, %6, %7 : vector<1x256xi32>
    %9 = arith.andi %4, %8 : vector<1x256xi1>
    %c1_i32 = arith.constant 1 : i32
    %10 = vector.broadcast %c1_i32 : i32 to vector<1x256xi32>
    %11 = arith.addi %0, %10 : vector<1x256xi32>
    %c0_i32_2 = arith.constant 0 : i32
    %12 = vector.broadcast %c0_i32_2 : i32 to vector<1x256xi32>
    %13 = arith.cmpi sge, %11, %12 : vector<1x256xi32>
    %c1_i32_3 = arith.constant 1 : i32
    %14 = vector.broadcast %c1_i32_3 : i32 to vector<1x256xi32>
    %15 = arith.addi %0, %14 : vector<1x256xi32>
    %c16_i32_4 = arith.constant 16 : i32
    %16 = vector.broadcast %c16_i32_4 : i32 to vector<1x256xi32>
    %17 = arith.cmpi slt, %15, %16 : vector<1x256xi32>
    %18 = arith.andi %13, %17 : vector<1x256xi1>
    %cst = arith.constant 0.000000e+00 : f32
    %19 = vector.broadcast %cst : f32 to vector<8x580xf32>
    %c0_5 = arith.constant 0 : index
    %c0_6 = arith.constant 0 : index
    %20 = vector.load %arg10[%c0_5, %c0_6] : memref<8x580xf32, #tpu.memory_space<vmem>>, vector<8x580xf32>
    tpu.vector_store %arg10[%c0_5, %c0_6], %19 {strides = array<i32>} : memref<8x580xf32, #tpu.memory_space<vmem>>, vector<8x580xf32>,
    %c0_7 = arith.constant 0 : index
    %c0_8 = arith.constant 0 : index
    %c0_9 = arith.constant 0 : index
    %21 = vector.load %arg1[%c0_7, %c0_8, %c0_9] : memref<2x4x256xf32, #tpu.memory_space<vmem>>, vector<1x4x256xf32>
    %22 = vector.shape_cast %21 : vector<1x4x256xf32> to vector<4x256xf32>
    %cst_10 = arith.constant 0.000000e+00 : f32
    %23 = vector.broadcast %cst_10 : f32 to vector<4x256xf32>
    %24 = arith.maximumf %22, %23 : vector<4x256xf32>
    %c0_11 = arith.constant 0 : index
    %c17 = arith.constant 17 : index
    %25 = vector.load %arg10[%c0_11, %c17] : memref<8x580xf32, #tpu.memory_space<vmem>>, vector<4x256xf32>
    tpu.vector_store %arg10[%c0_11, %c17], %24 {strides = array<i32>} : memref<8x580xf32, #tpu.memory_space<vmem>>, vector<4x256xf32>,
    %c1 = arith.constant 1 : index
    %c0_12 = arith.constant 0 : index
    %c0_13 = arith.constant 0 : index
    %26 = vector.load %arg1[%c1, %c0_12, %c0_13] : memref<2x4x256xf32, #tpu.memory_space<vmem>>, vector<1x4x256xf32>
    %27 = vector.shape_cast %26 : vector<1x4x256xf32> to vector<4x256xf32>
    %cst_14 = arith.constant 0.000000e+00 : f32
    %28 = vector.broadcast %cst_14 : f32 to vector<4x256xf32>
    %29 = arith.maximumf %27, %28 : vector<4x256xf32>
    %c0_15 = arith.constant 0 : index
    %c307 = arith.constant 307 : index
    %30 = vector.load %arg10[%c0_15, %c307] : memref<8x580xf32, #tpu.memory_space<vmem>>, vector<4x256xf32>
    tpu.vector_store %arg10[%c0_15, %c307], %29 {strides = array<i32>} : memref<8x580xf32, #tpu.memory_space<vmem>>, vector<4x256xf32>,
    %c0_16 = arith.constant 0 : index
    %c0_17 = arith.constant 0 : index
    %31 = vector.load %arg10[%c0_16, %c0_17] : memref<8x580xf32, #tpu.memory_space<vmem>>, vector<8x256xf32>
    %cst_18 = arith.constant 0.000000e+00 : f32
    %32 = vector.shape_cast %9 : vector<1x256xi1> to vector<1x256xi1>
    %33 = vector.broadcast %32 : vector<1x256xi1> to vector<8x256xi1>
    %34 = vector.broadcast %cst_18 : f32 to vector<8x256xf32>
    %35 = arith.select %33, %31, %34 : vector<8x256xi1>, vector<8x256xf32>
    %c0_19 = arith.constant 0 : index
    %c0_20 = arith.constant 0 : index
    %36 = vector.load %arg12[%c0_19, %c0_20] : memref<72x512xf32, #tpu.memory_space<vmem>>, vector<8x256xf32>
    tpu.vector_store %arg12[%c0_19, %c0_20], %35 {strides = array<i32>} : memref<72x512xf32, #tpu.memory_space<vmem>>, vector<8x256xf32>,
    %c0_21 = arith.constant 0 : index
    %c290 = arith.constant 290 : index
    %37 = vector.load %arg10[%c0_21, %c290] : memref<8x580xf32, #tpu.memory_space<vmem>>, vector<8x256xf32>
    %cst_22 = arith.constant 0.000000e+00 : f32
    %38 = vector.shape_cast %9 : vector<1x256xi1> to vector<1x256xi1>
    %39 = vector.broadcast %38 : vector<1x256xi1> to vector<8x256xi1>
    %40 = vector.broadcast %cst_22 : f32 to vector<8x256xf32>
    %41 = arith.select %39, %37, %40 : vector<8x256xi1>, vector<8x256xf32>
    %c0_23 = arith.constant 0 : index
    %c256 = arith.constant 256 : index
    %42 = vector.load %arg12[%c0_23, %c256] : memref<72x512xf32, #tpu.memory_space<vmem>>, vector<8x256xf32>
    tpu.vector_store %arg12[%c0_23, %c256], %41 {strides = array<i32>} : memref<72x512xf32, #tpu.memory_space<vmem>>, vector<8x256xf32>,
    %c0_24 = arith.constant 0 : index
    %c1_25 = arith.constant 1 : index
    %43 = vector.load %arg10[%c0_24, %c1_25] : memref<8x580xf32, #tpu.memory_space<vmem>>, vector<8x256xf32>
    %c8 = arith.constant 8 : index
    %c0_26 = arith.constant 0 : index
    %44 = vector.load %arg12[%c8, %c0_26] : memref<72x512xf32, #tpu.memory_space<vmem>>, vector<8x256xf32>
    tpu.vector_store %arg12[%c8, %c0_26], %43 {strides = array<i32>} : memref<72x512xf32, #tpu.memory_space<vmem>>, vector<8x256xf32>,
    %c0_27 = arith.constant 0 : index
    %c291 = arith.constant 291 : index
    %45 = vector.load %arg10[%c0_27, %c291] : memref<8x580xf32, #tpu.memory_space<vmem>>, vector<8x256xf32>
    %c8_28 = arith.constant 8 : index
    %c256_29 = arith.constant 256 : index
    %46 = vector.load %arg12[%c8_28, %c256_29] : memref<72x512xf32, #tpu.memory_space<vmem>>, vector<8x256xf32>
    tpu.vector_store %arg12[%c8_28, %c256_29], %45 {strides = array<i32>} : memref<72x512xf32, #tpu.memory_space<vmem>>, vector<8x256xf32>,
    %c0_30 = arith.constant 0 : index
    %c2 = arith.constant 2 : index
    %47 = vector.load %arg10[%c0_30, %c2] : memref<8x580xf32, #tpu.memory_space<vmem>>, vector<8x256xf32>
    %cst_31 = arith.constant 0.000000e+00 : f32
    %48 = vector.shape_cast %18 : vector<1x256xi1> to vector<1x256xi1>
    %49 = vector.broadcast %48 : vector<1x256xi1> to vector<8x256xi1>
    %50 = vector.broadcast %cst_31 : f32 to vector<8x256xf32>
    %51 = arith.select %49, %47, %50 : vector<8x256xi1>, vector<8x256xf32>
    %c16 = arith.constant 16 : index
    %c0_32 = arith.constant 0 : index
    %52 = vector.load %arg12[%c16, %c0_32] : memref<72x512xf32, #tpu.memory_space<vmem>>, vector<8x256xf32>
    tpu.vector_store %arg12[%c16, %c0_32], %51 {strides = array<i32>} : memref<72x512xf32, #tpu.memory_space<vmem>>, vector<8x256xf32>,
    %c0_33 = arith.constant 0 : index
    %c292 = arith.constant 292 : index
    %53 = vector.load %arg10[%c0_33, %c292] : memref<8x580xf32, #tpu.memory_space<vmem>>, vector<8x256xf32>
    %cst_34 = arith.constant 0.000000e+00 : f32
    %54 = vector.shape_cast %18 : vector<1x256xi1> to vector<1x256xi1>
    %55 = vector.broadcast %54 : vector<1x256xi1> to vector<8x256xi1>
    %56 = vector.broadcast %cst_34 : f32 to vector<8x256xf32>
    %57 = arith.select %55, %53, %56 : vector<8x256xi1>, vector<8x256xf32>
    %c16_35 = arith.constant 16 : index
    %c256_36 = arith.constant 256 : index
    %58 = vector.load %arg12[%c16_35, %c256_36] : memref<72x512xf32, #tpu.memory_space<vmem>>, vector<8x256xf32>
    tpu.vector_store %arg12[%c16_35, %c256_36], %57 {strides = array<i32>} : memref<72x512xf32, #tpu.memory_space<vmem>>, vector<8x256xf32>,
    %c0_37 = arith.constant 0 : index
    %c16_38 = arith.constant 16 : index
    %59 = vector.load %arg10[%c0_37, %c16_38] : memref<8x580xf32, #tpu.memory_space<vmem>>, vector<8x256xf32>
    %cst_39 = arith.constant 0.000000e+00 : f32
    %60 = vector.shape_cast %9 : vector<1x256xi1> to vector<1x256xi1>
    %61 = vector.broadcast %60 : vector<1x256xi1> to vector<8x256xi1>
    %62 = vector.broadcast %cst_39 : f32 to vector<8x256xf32>
    %63 = arith.select %61, %59, %62 : vector<8x256xi1>, vector<8x256xf32>
    %c24 = arith.constant 24 : index
    %c0_40 = arith.constant 0 : index
    %64 = vector.load %arg12[%c24, %c0_40] : memref<72x512xf32, #tpu.memory_space<vmem>>, vector<8x256xf32>
    tpu.vector_store %arg12[%c24, %c0_40], %63 {strides = array<i32>} : memref<72x512xf32, #tpu.memory_space<vmem>>, vector<8x256xf32>,
    %c0_41 = arith.constant 0 : index
    %c306 = arith.constant 306 : index
    %65 = vector.load %arg10[%c0_41, %c306] : memref<8x580xf32, #tpu.memory_space<vmem>>, vector<8x256xf32>
    %cst_42 = arith.constant 0.000000e+00 : f32
    %66 = vector.shape_cast %9 : vector<1x256xi1> to vector<1x256xi1>
    %67 = vector.broadcast %66 : vector<1x256xi1> to vector<8x256xi1>
    %68 = vector.broadcast %cst_42 : f32 to vector<8x256xf32>
    %69 = arith.select %67, %65, %68 : vector<8x256xi1>, vector<8x256xf32>
    %c24_43 = arith.constant 24 : index
    %c256_44 = arith.constant 256 : index
    %70 = vector.load %arg12[%c24_43, %c256_44] : memref<72x512xf32, #tpu.memory_space<vmem>>, vector<8x256xf32>
    tpu.vector_store %arg12[%c24_43, %c256_44], %69 {strides = array<i32>} : memref<72x512xf32, #tpu.memory_space<vmem>>, vector<8x256xf32>,
    %c0_45 = arith.constant 0 : index
    %c17_46 = arith.constant 17 : index
    %71 = vector.load %arg10[%c0_45, %c17_46] : memref<8x580xf32, #tpu.memory_space<vmem>>, vector<8x256xf32>
    %c32 = arith.constant 32 : index
    %c0_47 = arith.constant 0 : index
    %72 = vector.load %arg12[%c32, %c0_47] : memref<72x512xf32, #tpu.memory_space<vmem>>, vector<8x256xf32>
    tpu.vector_store %arg12[%c32, %c0_47], %71 {strides = array<i32>} : memref<72x512xf32, #tpu.memory_space<vmem>>, vector<8x256xf32>,
    %c0_48 = arith.constant 0 : index
    %c307_49 = arith.constant 307 : index
    %73 = vector.load %arg10[%c0_48, %c307_49] : memref<8x580xf32, #tpu.memory_space<vmem>>, vector<8x256xf32>
    %c32_50 = arith.constant 32 : index
    %c256_51 = arith.constant 256 : index
    %74 = vector.load %arg12[%c32_50, %c256_51] : memref<72x512xf32, #tpu.memory_space<vmem>>, vector<8x256xf32>
    tpu.vector_store %arg12[%c32_50, %c256_51], %73 {strides = array<i32>} : memref<72x512xf32, #tpu.memory_space<vmem>>, vector<8x256xf32>,
    %c0_52 = arith.constant 0 : index
    %c18 = arith.constant 18 : index
    %75 = vector.load %arg10[%c0_52, %c18] : memref<8x580xf32, #tpu.memory_space<vmem>>, vector<8x256xf32>
    %cst_53 = arith.constant 0.000000e+00 : f32
    %76 = vector.shape_cast %18 : vector<1x256xi1> to vector<1x256xi1>
    %77 = vector.broadcast %76 : vector<1x256xi1> to vector<8x256xi1>
    %78 = vector.broadcast %cst_53 : f32 to vector<8x256xf32>
    %79 = arith.select %77, %75, %78 : vector<8x256xi1>, vector<8x256xf32>
    %c40 = arith.constant 40 : index
    %c0_54 = arith.constant 0 : index
    %80 = vector.load %arg12[%c40, %c0_54] : memref<72x512xf32, #tpu.memory_space<vmem>>, vector<8x256xf32>
    tpu.vector_store %arg12[%c40, %c0_54], %79 {strides = array<i32>} : memref<72x512xf32, #tpu.memory_space<vmem>>, vector<8x256xf32>,
    %c0_55 = arith.constant 0 : index
    %c308 = arith.constant 308 : index
    %81 = vector.load %arg10[%c0_55, %c308] : memref<8x580xf32, #tpu.memory_space<vmem>>, vector<8x256xf32>
    %cst_56 = arith.constant 0.000000e+00 : f32
    %82 = vector.shape_cast %18 : vector<1x256xi1> to vector<1x256xi1>
    %83 = vector.broadcast %82 : vector<1x256xi1> to vector<8x256xi1>
    %84 = vector.broadcast %cst_56 : f32 to vector<8x256xf32>
    %85 = arith.select %83, %81, %84 : vector<8x256xi1>, vector<8x256xf32>
    %c40_57 = arith.constant 40 : index
    %c256_58 = arith.constant 256 : index
    %86 = vector.load %arg12[%c40_57, %c256_58] : memref<72x512xf32, #tpu.memory_space<vmem>>, vector<8x256xf32>
    tpu.vector_store %arg12[%c40_57, %c256_58], %85 {strides = array<i32>} : memref<72x512xf32, #tpu.memory_space<vmem>>, vector<8x256xf32>,
    %c0_59 = arith.constant 0 : index
    %c32_60 = arith.constant 32 : index
    %87 = vector.load %arg10[%c0_59, %c32_60] : memref<8x580xf32, #tpu.memory_space<vmem>>, vector<8x256xf32>
    %cst_61 = arith.constant 0.000000e+00 : f32
    %88 = vector.shape_cast %9 : vector<1x256xi1> to vector<1x256xi1>
    %89 = vector.broadcast %88 : vector<1x256xi1> to vector<8x256xi1>
    %90 = vector.broadcast %cst_61 : f32 to vector<8x256xf32>
    %91 = arith.select %89, %87, %90 : vector<8x256xi1>, vector<8x256xf32>
    %c48 = arith.constant 48 : index
    %c0_62 = arith.constant 0 : index
    %92 = vector.load %arg12[%c48, %c0_62] : memref<72x512xf32, #tpu.memory_space<vmem>>, vector<8x256xf32>
    tpu.vector_store %arg12[%c48, %c0_62], %91 {strides = array<i32>} : memref<72x512xf32, #tpu.memory_space<vmem>>, vector<8x256xf32>,
    %c0_63 = arith.constant 0 : index
    %c322 = arith.constant 322 : index
    %93 = vector.load %arg10[%c0_63, %c322] : memref<8x580xf32, #tpu.memory_space<vmem>>, vector<8x256xf32>
    %cst_64 = arith.constant 0.000000e+00 : f32
    %94 = vector.shape_cast %9 : vector<1x256xi1> to vector<1x256xi1>
    %95 = vector.broadcast %94 : vector<1x256xi1> to vector<8x256xi1>
    %96 = vector.broadcast %cst_64 : f32 to vector<8x256xf32>
    %97 = arith.select %95, %93, %96 : vector<8x256xi1>, vector<8x256xf32>
    %c48_65 = arith.constant 48 : index
    %c256_66 = arith.constant 256 : index
    %98 = vector.load %arg12[%c48_65, %c256_66] : memref<72x512xf32, #tpu.memory_space<vmem>>, vector<8x256xf32>
    tpu.vector_store %arg12[%c48_65, %c256_66], %97 {strides = array<i32>} : memref<72x512xf32, #tpu.memory_space<vmem>>, vector<8x256xf32>,
    %c0_67 = arith.constant 0 : index
    %c33 = arith.constant 33 : index
    %99 = vector.load %arg10[%c0_67, %c33] : memref<8x580xf32, #tpu.memory_space<vmem>>, vector<8x256xf32>
    %c56 = arith.constant 56 : index
    %c0_68 = arith.constant 0 : index
    %100 = vector.load %arg12[%c56, %c0_68] : memref<72x512xf32, #tpu.memory_space<vmem>>, vector<8x256xf32>
    tpu.vector_store %arg12[%c56, %c0_68], %99 {strides = array<i32>} : memref<72x512xf32, #tpu.memory_space<vmem>>, vector<8x256xf32>,
    %c0_69 = arith.constant 0 : index
    %c323 = arith.constant 323 : index
    %101 = vector.load %arg10[%c0_69, %c323] : memref<8x580xf32, #tpu.memory_space<vmem>>, vector<8x256xf32>
    %c56_70 = arith.constant 56 : index
    %c256_71 = arith.constant 256 : index
    %102 = vector.load %arg12[%c56_70, %c256_71] : memref<72x512xf32, #tpu.memory_space<vmem>>, vector<8x256xf32>
    tpu.vector_store %arg12[%c56_70, %c256_71], %101 {strides = array<i32>} : memref<72x512xf32, #tpu.memory_space<vmem>>, vector<8x256xf32>,
    %c0_72 = arith.constant 0 : index
    %c34 = arith.constant 34 : index
    %103 = vector.load %arg10[%c0_72, %c34] : memref<8x580xf32, #tpu.memory_space<vmem>>, vector<8x256xf32>
    %cst_73 = arith.constant 0.000000e+00 : f32
    %104 = vector.shape_cast %18 : vector<1x256xi1> to vector<1x256xi1>
    %105 = vector.broadcast %104 : vector<1x256xi1> to vector<8x256xi1>
    %106 = vector.broadcast %cst_73 : f32 to vector<8x256xf32>
    %107 = arith.select %105, %103, %106 : vector<8x256xi1>, vector<8x256xf32>
    %c64 = arith.constant 64 : index
    %c0_74 = arith.constant 0 : index
    %108 = vector.load %arg12[%c64, %c0_74] : memref<72x512xf32, #tpu.memory_space<vmem>>, vector<8x256xf32>
    tpu.vector_store %arg12[%c64, %c0_74], %107 {strides = array<i32>} : memref<72x512xf32, #tpu.memory_space<vmem>>, vector<8x256xf32>,
    %c0_75 = arith.constant 0 : index
    %c324 = arith.constant 324 : index
    %109 = vector.load %arg10[%c0_75, %c324] : memref<8x580xf32, #tpu.memory_space<vmem>>, vector<8x256xf32>
    %cst_76 = arith.constant 0.000000e+00 : f32
    %110 = vector.shape_cast %18 : vector<1x256xi1> to vector<1x256xi1>
    %111 = vector.broadcast %110 : vector<1x256xi1> to vector<8x256xi1>
    %112 = vector.broadcast %cst_76 : f32 to vector<8x256xf32>
    %113 = arith.select %111, %109, %112 : vector<8x256xi1>, vector<8x256xf32>
    %c64_77 = arith.constant 64 : index
    %c256_78 = arith.constant 256 : index
    %114 = vector.load %arg12[%c64_77, %c256_78] : memref<72x512xf32, #tpu.memory_space<vmem>>, vector<8x256xf32>
    tpu.vector_store %arg12[%c64_77, %c256_78], %113 {strides = array<i32>} : memref<72x512xf32, #tpu.memory_space<vmem>>, vector<8x256xf32>,
    %c0_79 = arith.constant 0 : index
    %c0_80 = arith.constant 0 : index
    %115 = vector.load %arg3[%c0_79, %c0_80] : memref<8x72xf32, #tpu.memory_space<vmem>>, vector<8x72xf32>
    %c0_81 = arith.constant 0 : index
    %c0_82 = arith.constant 0 : index
    %116 = vector.load %arg12[%c0_81, %c0_82] : memref<72x512xf32, #tpu.memory_space<vmem>>, vector<72x512xf32>
    %117 = arith.truncf %115 : vector<8x72xf32> to vector<8x72xbf16>
    %118 = arith.extf %117 : vector<8x72xbf16> to vector<8x72xf32>
    %119 = arith.subf %115, %118 : vector<8x72xf32>
    %120 = arith.truncf %119 : vector<8x72xf32> to vector<8x72xbf16>
    %121 = arith.truncf %116 : vector<72x512xf32> to vector<72x512xbf16>
    %122 = arith.extf %121 : vector<72x512xbf16> to vector<72x512xf32>
    %123 = arith.subf %116, %122 : vector<72x512xf32>
    %124 = arith.truncf %123 : vector<72x512xf32> to vector<72x512xbf16>
    %cst_83 = arith.constant dense<0.000000e+00> : vector<8x512xf32>
    %125 = tpu.matmul %117, %121, %cst_83 {dimension_numbers = #tpu.dot_dimension_numbers<[1], [0], [0], [1], [0, 0, 1, 1], [], []>} : vector<8x72xbf16>, vector<72x512xbf16>, vector<8x512xf32> -> vector<8x512xf32>
    %cst_84 = arith.constant dense<0.000000e+00> : vector<8x512xf32>
    %126 = tpu.matmul %120, %121, %cst_84 {dimension_numbers = #tpu.dot_dimension_numbers<[1], [0], [0], [1], [0, 0, 1, 1], [], []>} : vector<8x72xbf16>, vector<72x512xbf16>, vector<8x512xf32> -> vector<8x512xf32>
    %127 = arith.addf %125, %126 : vector<8x512xf32>
    %cst_85 = arith.constant dense<0.000000e+00> : vector<8x512xf32>
    %128 = tpu.matmul %117, %124, %cst_85 {dimension_numbers = #tpu.dot_dimension_numbers<[1], [0], [0], [1], [0, 0, 1, 1], [], []>} : vector<8x72xbf16>, vector<72x512xbf16>, vector<8x512xf32> -> vector<8x512xf32>
    %129 = arith.addf %127, %128 : vector<8x512xf32>
    %c0_86 = arith.constant 0 : index
    %c0_87 = arith.constant 0 : index
    %130 = vector.load %arg4[%c0_86, %c0_87] : memref<8x1xf32, #tpu.memory_space<vmem>>, vector<8x1xf32>
    %131 = vector.broadcast %130 : vector<8x1xf32> to vector<8x512xf32>
    %132 = arith.addf %129, %131 : vector<8x512xf32>
    %cst_88 = arith.constant 0.000000e+00 : f32
    %133 = vector.broadcast %cst_88 : f32 to vector<8x512xf32>
    %134 = arith.maximumf %132, %133 : vector<8x512xf32>
    %cst_89 = arith.constant 0.000000e+00 : f32
    %135 = vector.broadcast %cst_89 : f32 to vector<8x17xf32>
    %c0_90 = arith.constant 0 : index
    %c0_91 = arith.constant 0 : index
    %136 = vector.load %arg11[%c0_90, %c0_91] : memref<8x580xf32, #tpu.memory_space<vmem>>, vector<8x17xf32>
    tpu.vector_store %arg11[%c0_90, %c0_91], %135 {strides = array<i32>} : memref<8x580xf32, #tpu.memory_space<vmem>>, vector<8x17xf32>,
    %cst_92 = arith.constant 0.000000e+00 : f32
    %137 = vector.broadcast %cst_92 : f32 to vector<8x17xf32>
    %c0_93 = arith.constant 0 : index
    %c273 = arith.constant 273 : index
    %138 = vector.load %arg11[%c0_93, %c273] : memref<8x580xf32, #tpu.memory_space<vmem>>, vector<8x17xf32>
    tpu.vector_store %arg11[%c0_93, %c273], %137 {strides = array<i32>} : memref<8x580xf32, #tpu.memory_space<vmem>>, vector<8x17xf32>,
    %139 = vector.extract_strided_slice %134 {offsets = [0, 0], sizes = [8, 256], strides = [1, 1]} : vector<8x512xf32> to vector<8x256xf32>
    %c0_94 = arith.constant 0 : index
    %c17_95 = arith.constant 17 : index
    %140 = vector.load %arg11[%c0_94, %c17_95] : memref<8x580xf32, #tpu.memory_space<vmem>>, vector<8x256xf32>
    tpu.vector_store %arg11[%c0_94, %c17_95], %139 {strides = array<i32>} : memref<8x580xf32, #tpu.memory_space<vmem>>, vector<8x256xf32>,
    %cst_96 = arith.constant 0.000000e+00 : f32
    %141 = vector.broadcast %cst_96 : f32 to vector<8x17xf32>
    %c0_97 = arith.constant 0 : index
    %c290_98 = arith.constant 290 : index
    %142 = vector.load %arg11[%c0_97, %c290_98] : memref<8x580xf32, #tpu.memory_space<vmem>>, vector<8x17xf32>
    tpu.vector_store %arg11[%c0_97, %c290_98], %141 {strides = array<i32>} : memref<8x580xf32, #tpu.memory_space<vmem>>, vector<8x17xf32>,
    %cst_99 = arith.constant 0.000000e+00 : f32
    %143 = vector.broadcast %cst_99 : f32 to vector<8x17xf32>
    %c0_100 = arith.constant 0 : index
    %c563 = arith.constant 563 : index
    %144 = vector.load %arg11[%c0_100, %c563] : memref<8x580xf32, #tpu.memory_space<vmem>>, vector<8x17xf32>
    tpu.vector_store %arg11[%c0_100, %c563], %143 {strides = array<i32>} : memref<8x580xf32, #tpu.memory_space<vmem>>, vector<8x17xf32>,
    %145 = vector.extract_strided_slice %134 {offsets = [0, 256], sizes = [8, 256], strides = [1, 1]} : vector<8x512xf32> to vector<8x256xf32>
    %c0_101 = arith.constant 0 : index
    %c307_102 = arith.constant 307 : index
    %146 = vector.load %arg11[%c0_101, %c307_102] : memref<8x580xf32, #tpu.memory_space<vmem>>, vector<8x256xf32>
    tpu.vector_store %arg11[%c0_101, %c307_102], %145 {strides = array<i32>} : memref<8x580xf32, #tpu.memory_space<vmem>>, vector<8x256xf32>,
    %c0_103 = arith.constant 0 : index
    %c0_104 = arith.constant 0 : index
    %147 = vector.load %arg11[%c0_103, %c0_104] : memref<8x580xf32, #tpu.memory_space<vmem>>, vector<8x256xf32>
    %cst_105 = arith.constant 0.000000e+00 : f32
    %148 = vector.shape_cast %9 : vector<1x256xi1> to vector<1x256xi1>
    %149 = vector.broadcast %148 : vector<1x256xi1> to vector<8x256xi1>
    %150 = vector.broadcast %cst_105 : f32 to vector<8x256xf32>
    %151 = arith.select %149, %147, %150 : vector<8x256xi1>, vector<8x256xf32>
    %c0_106 = arith.constant 0 : index
    %c0_107 = arith.constant 0 : index
    %152 = vector.load %arg13[%c0_106, %c0_107] : memref<72x512xf32, #tpu.memory_space<vmem>>, vector<8x256xf32>
    tpu.vector_store %arg13[%c0_106, %c0_107], %151 {strides = array<i32>} : memref<72x512xf32, #tpu.memory_space<vmem>>, vector<8x256xf32>,
    %c0_108 = arith.constant 0 : index
    %c290_109 = arith.constant 290 : index
    %153 = vector.load %arg11[%c0_108, %c290_109] : memref<8x580xf32, #tpu.memory_space<vmem>>, vector<8x256xf32>
    %cst_110 = arith.constant 0.000000e+00 : f32
    %154 = vector.shape_cast %9 : vector<1x256xi1> to vector<1x256xi1>
    %155 = vector.broadcast %154 : vector<1x256xi1> to vector<8x256xi1>
    %156 = vector.broadcast %cst_110 : f32 to vector<8x256xf32>
    %157 = arith.select %155, %153, %156 : vector<8x256xi1>, vector<8x256xf32>
    %c0_111 = arith.constant 0 : index
    %c256_112 = arith.constant 256 : index
    %158 = vector.load %arg13[%c0_111, %c256_112] : memref<72x512xf32, #tpu.memory_space<vmem>>, vector<8x256xf32>
    tpu.vector_store %arg13[%c0_111, %c256_112], %157 {strides = array<i32>} : memref<72x512xf32, #tpu.memory_space<vmem>>, vector<8x256xf32>,
    %c0_113 = arith.constant 0 : index
    %c1_114 = arith.constant 1 : index
    %159 = vector.load %arg11[%c0_113, %c1_114] : memref<8x580xf32, #tpu.memory_space<vmem>>, vector<8x256xf32>
    %c8_115 = arith.constant 8 : index
    %c0_116 = arith.constant 0 : index
    %160 = vector.load %arg13[%c8_115, %c0_116] : memref<72x512xf32, #tpu.memory_space<vmem>>, vector<8x256xf32>
    tpu.vector_store %arg13[%c8_115, %c0_116], %159 {strides = array<i32>} : memref<72x512xf32, #tpu.memory_space<vmem>>, vector<8x256xf32>,
    %c0_117 = arith.constant 0 : index
    %c291_118 = arith.constant 291 : index
    %161 = vector.load %arg11[%c0_117, %c291_118] : memref<8x580xf32, #tpu.memory_space<vmem>>, vector<8x256xf32>
    %c8_119 = arith.constant 8 : index
    %c256_120 = arith.constant 256 : index
    %162 = vector.load %arg13[%c8_119, %c256_120] : memref<72x512xf32, #tpu.memory_space<vmem>>, vector<8x256xf32>
    tpu.vector_store %arg13[%c8_119, %c256_120], %161 {strides = array<i32>} : memref<72x512xf32, #tpu.memory_space<vmem>>, vector<8x256xf32>,
    %c0_121 = arith.constant 0 : index
    %c2_122 = arith.constant 2 : index
    %163 = vector.load %arg11[%c0_121, %c2_122] : memref<8x580xf32, #tpu.memory_space<vmem>>, vector<8x256xf32>
    %cst_123 = arith.constant 0.000000e+00 : f32
    %164 = vector.shape_cast %18 : vector<1x256xi1> to vector<1x256xi1>
    %165 = vector.broadcast %164 : vector<1x256xi1> to vector<8x256xi1>
    %166 = vector.broadcast %cst_123 : f32 to vector<8x256xf32>
    %167 = arith.select %165, %163, %166 : vector<8x256xi1>, vector<8x256xf32>
    %c16_124 = arith.constant 16 : index
    %c0_125 = arith.constant 0 : index
    %168 = vector.load %arg13[%c16_124, %c0_125] : memref<72x512xf32, #tpu.memory_space<vmem>>, vector<8x256xf32>
    tpu.vector_store %arg13[%c16_124, %c0_125], %167 {strides = array<i32>} : memref<72x512xf32, #tpu.memory_space<vmem>>, vector<8x256xf32>,
    %c0_126 = arith.constant 0 : index
    %c292_127 = arith.constant 292 : index
    %169 = vector.load %arg11[%c0_126, %c292_127] : memref<8x580xf32, #tpu.memory_space<vmem>>, vector<8x256xf32>
    %cst_128 = arith.constant 0.000000e+00 : f32
    %170 = vector.shape_cast %18 : vector<1x256xi1> to vector<1x256xi1>
    %171 = vector.broadcast %170 : vector<1x256xi1> to vector<8x256xi1>
    %172 = vector.broadcast %cst_128 : f32 to vector<8x256xf32>
    %173 = arith.select %171, %169, %172 : vector<8x256xi1>, vector<8x256xf32>
    %c16_129 = arith.constant 16 : index
    %c256_130 = arith.constant 256 : index
    %174 = vector.load %arg13[%c16_129, %c256_130] : memref<72x512xf32, #tpu.memory_space<vmem>>, vector<8x256xf32>
    tpu.vector_store %arg13[%c16_129, %c256_130], %173 {strides = array<i32>} : memref<72x512xf32, #tpu.memory_space<vmem>>, vector<8x256xf32>,
    %c0_131 = arith.constant 0 : index
    %c16_132 = arith.constant 16 : index
    %175 = vector.load %arg11[%c0_131, %c16_132] : memref<8x580xf32, #tpu.memory_space<vmem>>, vector<8x256xf32>
    %cst_133 = arith.constant 0.000000e+00 : f32
    %176 = vector.shape_cast %9 : vector<1x256xi1> to vector<1x256xi1>
    %177 = vector.broadcast %176 : vector<1x256xi1> to vector<8x256xi1>
    %178 = vector.broadcast %cst_133 : f32 to vector<8x256xf32>
    %179 = arith.select %177, %175, %178 : vector<8x256xi1>, vector<8x256xf32>
    %c24_134 = arith.constant 24 : index
    %c0_135 = arith.constant 0 : index
    %180 = vector.load %arg13[%c24_134, %c0_135] : memref<72x512xf32, #tpu.memory_space<vmem>>, vector<8x256xf32>
    tpu.vector_store %arg13[%c24_134, %c0_135], %179 {strides = array<i32>} : memref<72x512xf32, #tpu.memory_space<vmem>>, vector<8x256xf32>,
    %c0_136 = arith.constant 0 : index
    %c306_137 = arith.constant 306 : index
    %181 = vector.load %arg11[%c0_136, %c306_137] : memref<8x580xf32, #tpu.memory_space<vmem>>, vector<8x256xf32>
    %cst_138 = arith.constant 0.000000e+00 : f32
    %182 = vector.shape_cast %9 : vector<1x256xi1> to vector<1x256xi1>
    %183 = vector.broadcast %182 : vector<1x256xi1> to vector<8x256xi1>
    %184 = vector.broadcast %cst_138 : f32 to vector<8x256xf32>
    %185 = arith.select %183, %181, %184 : vector<8x256xi1>, vector<8x256xf32>
    %c24_139 = arith.constant 24 : index
    %c256_140 = arith.constant 256 : index
    %186 = vector.load %arg13[%c24_139, %c256_140] : memref<72x512xf32, #tpu.memory_space<vmem>>, vector<8x256xf32>
    tpu.vector_store %arg13[%c24_139, %c256_140], %185 {strides = array<i32>} : memref<72x512xf32, #tpu.memory_space<vmem>>, vector<8x256xf32>,
    %c0_141 = arith.constant 0 : index
    %c17_142 = arith.constant 17 : index
    %187 = vector.load %arg11[%c0_141, %c17_142] : memref<8x580xf32, #tpu.memory_space<vmem>>, vector<8x256xf32>
    %c32_143 = arith.constant 32 : index
    %c0_144 = arith.constant 0 : index
    %188 = vector.load %arg13[%c32_143, %c0_144] : memref<72x512xf32, #tpu.memory_space<vmem>>, vector<8x256xf32>
    tpu.vector_store %arg13[%c32_143, %c0_144], %187 {strides = array<i32>} : memref<72x512xf32, #tpu.memory_space<vmem>>, vector<8x256xf32>,
    %c0_145 = arith.constant 0 : index
    %c307_146 = arith.constant 307 : index
    %189 = vector.load %arg11[%c0_145, %c307_146] : memref<8x580xf32, #tpu.memory_space<vmem>>, vector<8x256xf32>
    %c32_147 = arith.constant 32 : index
    %c256_148 = arith.constant 256 : index
    %190 = vector.load %arg13[%c32_147, %c256_148] : memref<72x512xf32, #tpu.memory_space<vmem>>, vector<8x256xf32>
    tpu.vector_store %arg13[%c32_147, %c256_148], %189 {strides = array<i32>} : memref<72x512xf32, #tpu.memory_space<vmem>>, vector<8x256xf32>,
    %c0_149 = arith.constant 0 : index
    %c18_150 = arith.constant 18 : index
    %191 = vector.load %arg11[%c0_149, %c18_150] : memref<8x580xf32, #tpu.memory_space<vmem>>, vector<8x256xf32>
    %cst_151 = arith.constant 0.000000e+00 : f32
    %192 = vector.shape_cast %18 : vector<1x256xi1> to vector<1x256xi1>
    %193 = vector.broadcast %192 : vector<1x256xi1> to vector<8x256xi1>
    %194 = vector.broadcast %cst_151 : f32 to vector<8x256xf32>
    %195 = arith.select %193, %191, %194 : vector<8x256xi1>, vector<8x256xf32>
    %c40_152 = arith.constant 40 : index
    %c0_153 = arith.constant 0 : index
    %196 = vector.load %arg13[%c40_152, %c0_153] : memref<72x512xf32, #tpu.memory_space<vmem>>, vector<8x256xf32>
    tpu.vector_store %arg13[%c40_152, %c0_153], %195 {strides = array<i32>} : memref<72x512xf32, #tpu.memory_space<vmem>>, vector<8x256xf32>,
    %c0_154 = arith.constant 0 : index
    %c308_155 = arith.constant 308 : index
    %197 = vector.load %arg11[%c0_154, %c308_155] : memref<8x580xf32, #tpu.memory_space<vmem>>, vector<8x256xf32>
    %cst_156 = arith.constant 0.000000e+00 : f32
    %198 = vector.shape_cast %18 : vector<1x256xi1> to vector<1x256xi1>
    %199 = vector.broadcast %198 : vector<1x256xi1> to vector<8x256xi1>
    %200 = vector.broadcast %cst_156 : f32 to vector<8x256xf32>
    %201 = arith.select %199, %197, %200 : vector<8x256xi1>, vector<8x256xf32>
    %c40_157 = arith.constant 40 : index
    %c256_158 = arith.constant 256 : index
    %202 = vector.load %arg13[%c40_157, %c256_158] : memref<72x512xf32, #tpu.memory_space<vmem>>, vector<8x256xf32>
    tpu.vector_store %arg13[%c40_157, %c256_158], %201 {strides = array<i32>} : memref<72x512xf32, #tpu.memory_space<vmem>>, vector<8x256xf32>,
    %c0_159 = arith.constant 0 : index
    %c32_160 = arith.constant 32 : index
    %203 = vector.load %arg11[%c0_159, %c32_160] : memref<8x580xf32, #tpu.memory_space<vmem>>, vector<8x256xf32>
    %cst_161 = arith.constant 0.000000e+00 : f32
    %204 = vector.shape_cast %9 : vector<1x256xi1> to vector<1x256xi1>
    %205 = vector.broadcast %204 : vector<1x256xi1> to vector<8x256xi1>
    %206 = vector.broadcast %cst_161 : f32 to vector<8x256xf32>
    %207 = arith.select %205, %203, %206 : vector<8x256xi1>, vector<8x256xf32>
    %c48_162 = arith.constant 48 : index
    %c0_163 = arith.constant 0 : index
    %208 = vector.load %arg13[%c48_162, %c0_163] : memref<72x512xf32, #tpu.memory_space<vmem>>, vector<8x256xf32>
    tpu.vector_store %arg13[%c48_162, %c0_163], %207 {strides = array<i32>} : memref<72x512xf32, #tpu.memory_space<vmem>>, vector<8x256xf32>,
    %c0_164 = arith.constant 0 : index
    %c322_165 = arith.constant 322 : index
    %209 = vector.load %arg11[%c0_164, %c322_165] : memref<8x580xf32, #tpu.memory_space<vmem>>, vector<8x256xf32>
    %cst_166 = arith.constant 0.000000e+00 : f32
    %210 = vector.shape_cast %9 : vector<1x256xi1> to vector<1x256xi1>
    %211 = vector.broadcast %210 : vector<1x256xi1> to vector<8x256xi1>
    %212 = vector.broadcast %cst_166 : f32 to vector<8x256xf32>
    %213 = arith.select %211, %209, %212 : vector<8x256xi1>, vector<8x256xf32>
    %c48_167 = arith.constant 48 : index
    %c256_168 = arith.constant 256 : index
    %214 = vector.load %arg13[%c48_167, %c256_168] : memref<72x512xf32, #tpu.memory_space<vmem>>, vector<8x256xf32>
    tpu.vector_store %arg13[%c48_167, %c256_168], %213 {strides = array<i32>} : memref<72x512xf32, #tpu.memory_space<vmem>>, vector<8x256xf32>,
    %c0_169 = arith.constant 0 : index
    %c33_170 = arith.constant 33 : index
    %215 = vector.load %arg11[%c0_169, %c33_170] : memref<8x580xf32, #tpu.memory_space<vmem>>, vector<8x256xf32>
    %c56_171 = arith.constant 56 : index
    %c0_172 = arith.constant 0 : index
    %216 = vector.load %arg13[%c56_171, %c0_172] : memref<72x512xf32, #tpu.memory_space<vmem>>, vector<8x256xf32>
    tpu.vector_store %arg13[%c56_171, %c0_172], %215 {strides = array<i32>} : memref<72x512xf32, #tpu.memory_space<vmem>>, vector<8x256xf32>,
    %c0_173 = arith.constant 0 : index
    %c323_174 = arith.constant 323 : index
    %217 = vector.load %arg11[%c0_173, %c323_174] : memref<8x580xf32, #tpu.memory_space<vmem>>, vector<8x256xf32>
    %c56_175 = arith.constant 56 : index
    %c256_176 = arith.constant 256 : index
    %218 = vector.load %arg13[%c56_175, %c256_176] : memref<72x512xf32, #tpu.memory_space<vmem>>, vector<8x256xf32>
    tpu.vector_store %arg13[%c56_175, %c256_176], %217 {strides = array<i32>} : memref<72x512xf32, #tpu.memory_space<vmem>>, vector<8x256xf32>,
    %c0_177 = arith.constant 0 : index
    %c34_178 = arith.constant 34 : index
    %219 = vector.load %arg11[%c0_177, %c34_178] : memref<8x580xf32, #tpu.memory_space<vmem>>, vector<8x256xf32>
    %cst_179 = arith.constant 0.000000e+00 : f32
    %220 = vector.shape_cast %18 : vector<1x256xi1> to vector<1x256xi1>
    %221 = vector.broadcast %220 : vector<1x256xi1> to vector<8x256xi1>
    %222 = vector.broadcast %cst_179 : f32 to vector<8x256xf32>
    %223 = arith.select %221, %219, %222 : vector<8x256xi1>, vector<8x256xf32>
    %c64_180 = arith.constant 64 : index
    %c0_181 = arith.constant 0 : index
    %224 = vector.load %arg13[%c64_180, %c0_181] : memref<72x512xf32, #tpu.memory_space<vmem>>, vector<8x256xf32>
    tpu.vector_store %arg13[%c64_180, %c0_181], %223 {strides = array<i32>} : memref<72x512xf32, #tpu.memory_space<vmem>>, vector<8x256xf32>,
    %c0_182 = arith.constant 0 : index
    %c324_183 = arith.constant 324 : index
    %225 = vector.load %arg11[%c0_182, %c324_183] : memref<8x580xf32, #tpu.memory_space<vmem>>, vector<8x256xf32>
    %cst_184 = arith.constant 0.000000e+00 : f32
    %226 = vector.shape_cast %18 : vector<1x256xi1> to vector<1x256xi1>
    %227 = vector.broadcast %226 : vector<1x256xi1> to vector<8x256xi1>
    %228 = vector.broadcast %cst_184 : f32 to vector<8x256xf32>
    %229 = arith.select %227, %225, %228 : vector<8x256xi1>, vector<8x256xf32>
    %c64_185 = arith.constant 64 : index
    %c256_186 = arith.constant 256 : index
    %230 = vector.load %arg13[%c64_185, %c256_186] : memref<72x512xf32, #tpu.memory_space<vmem>>, vector<8x256xf32>
    tpu.vector_store %arg13[%c64_185, %c256_186], %229 {strides = array<i32>} : memref<72x512xf32, #tpu.memory_space<vmem>>, vector<8x256xf32>,
    %c0_187 = arith.constant 0 : index
    %c0_188 = arith.constant 0 : index
    %231 = vector.load %arg5[%c0_187, %c0_188] : memref<4x72xf32, #tpu.memory_space<vmem>>, vector<4x72xf32>
    %c0_189 = arith.constant 0 : index
    %c0_190 = arith.constant 0 : index
    %232 = vector.load %arg13[%c0_189, %c0_190] : memref<72x512xf32, #tpu.memory_space<vmem>>, vector<72x512xf32>
    %233 = arith.truncf %231 : vector<4x72xf32> to vector<4x72xbf16>
    %234 = arith.extf %233 : vector<4x72xbf16> to vector<4x72xf32>
    %235 = arith.subf %231, %234 : vector<4x72xf32>
    %236 = arith.truncf %235 : vector<4x72xf32> to vector<4x72xbf16>
    %237 = arith.truncf %232 : vector<72x512xf32> to vector<72x512xbf16>
    %238 = arith.extf %237 : vector<72x512xbf16> to vector<72x512xf32>
    %239 = arith.subf %232, %238 : vector<72x512xf32>
    %240 = arith.truncf %239 : vector<72x512xf32> to vector<72x512xbf16>
    %cst_191 = arith.constant dense<0.000000e+00> : vector<4x512xf32>
    %241 = tpu.matmul %233, %237, %cst_191 {dimension_numbers = #tpu.dot_dimension_numbers<[1], [0], [0], [1], [0, 0, 1, 1], [], []>} : vector<4x72xbf16>, vector<72x512xbf16>, vector<4x512xf32> -> vector<4x512xf32>
    %cst_192 = arith.constant dense<0.000000e+00> : vector<4x512xf32>
    %242 = tpu.matmul %236, %237, %cst_192 {dimension_numbers = #tpu.dot_dimension_numbers<[1], [0], [0], [1], [0, 0, 1, 1], [], []>} : vector<4x72xbf16>, vector<72x512xbf16>, vector<4x512xf32> -> vector<4x512xf32>
    %243 = arith.addf %241, %242 : vector<4x512xf32>
    %cst_193 = arith.constant dense<0.000000e+00> : vector<4x512xf32>
    %244 = tpu.matmul %233, %240, %cst_193 {dimension_numbers = #tpu.dot_dimension_numbers<[1], [0], [0], [1], [0, 0, 1, 1], [], []>} : vector<4x72xbf16>, vector<72x512xbf16>, vector<4x512xf32> -> vector<4x512xf32>
    %245 = arith.addf %243, %244 : vector<4x512xf32>
    %c0_194 = arith.constant 0 : index
    %c0_195 = arith.constant 0 : index
    %246 = vector.load %arg6[%c0_194, %c0_195] : memref<4x1xf32, #tpu.memory_space<vmem>>, vector<4x1xf32>
    %247 = vector.broadcast %246 : vector<4x1xf32> to vector<4x512xf32>
    %248 = arith.addf %245, %247 : vector<4x512xf32>
    %c0_196 = arith.constant 0 : index
    %c0_197 = arith.constant 0 : index
    %c0_198 = arith.constant 0 : index
    %249 = vector.load %arg1[%c0_196, %c0_197, %c0_198] : memref<2x4x256xf32, #tpu.memory_space<vmem>>, vector<1x4x256xf32>
    %250 = vector.shape_cast %249 : vector<1x4x256xf32> to vector<4x256xf32>
    %251 = vector.extract_strided_slice %248 {offsets = [0, 0], sizes = [4, 256], strides = [1, 1]} : vector<4x512xf32> to vector<4x256xf32>
    %252 = arith.addf %251, %250 : vector<4x256xf32>
    %c0_199 = arith.constant 0 : index
    %c0_200 = arith.constant 0 : index
    %253 = vector.load %arg9[%c0_199, %c0_200] : memref<4x512xf32, #tpu.memory_space<vmem>>, vector<4x256xf32>
    tpu.vector_store %arg9[%c0_199, %c0_200], %252 {strides = array<i32>} : memref<4x512xf32, #tpu.memory_space<vmem>>, vector<4x256xf32>,
    %c1_201 = arith.constant 1 : index
    %c0_202 = arith.constant 0 : index
    %c0_203 = arith.constant 0 : index
    %254 = vector.load %arg1[%c1_201, %c0_202, %c0_203] : memref<2x4x256xf32, #tpu.memory_space<vmem>>, vector<1x4x256xf32>
    %255 = vector.shape_cast %254 : vector<1x4x256xf32> to vector<4x256xf32>
    %256 = vector.extract_strided_slice %248 {offsets = [0, 256], sizes = [4, 256], strides = [1, 1]} : vector<4x512xf32> to vector<4x256xf32>
    %257 = arith.addf %256, %255 : vector<4x256xf32>
    %c0_204 = arith.constant 0 : index
    %c256_205 = arith.constant 256 : index
    %258 = vector.load %arg9[%c0_204, %c256_205] : memref<4x512xf32, #tpu.memory_space<vmem>>, vector<4x256xf32>
    tpu.vector_store %arg9[%c0_204, %c256_205], %257 {strides = array<i32>} : memref<4x512xf32, #tpu.memory_space<vmem>>, vector<4x256xf32>,
    return
  }
  func.func @transform_0(%arg0: i32) -> (i32, i32, i32) {
    %c0_i32 = arith.constant 0 : i32
    %c0_i32_0 = arith.constant 0 : i32
    %c0_i32_1 = arith.constant 0 : i32
    return %arg0, %c0_i32, %c0_i32_0 : i32, i32, i32
  }
  func.func @transform_1(%arg0: i32) -> (i32, i32) {
    %c0_i32 = arith.constant 0 : i32
    %c0_i32_0 = arith.constant 0 : i32
    %c0_i32_1 = arith.constant 0 : i32
    return %c0_i32, %c0_i32_0 : i32, i32
  }
  func.func @transform_2(%arg0: i32) -> (i32, i32) {
    %c0_i32 = arith.constant 0 : i32
    %c0_i32_0 = arith.constant 0 : i32
    %c0_i32_1 = arith.constant 0 : i32
    return %c0_i32, %c0_i32_0 : i32, i32
  }
  func.func @transform_3(%arg0: i32) -> (i32, i32) {
    %c0_i32 = arith.constant 0 : i32
    %c0_i32_0 = arith.constant 0 : i32
    %c0_i32_1 = arith.constant 0 : i32
    return %c0_i32, %c0_i32_0 : i32, i32
  }
  func.func @transform_4(%arg0: i32) -> (i32, i32) {
    %c0_i32 = arith.constant 0 : i32
    %c0_i32_0 = arith.constant 0 : i32
    %c0_i32_1 = arith.constant 0 : i32
    return %c0_i32, %c0_i32_0 : i32, i32
  }
  func.func @transform_5(%arg0: i32) -> (i32, i32) {
    %c0_i32 = arith.constant 0 : i32
    %c0_i32_0 = arith.constant 0 : i32
    %c0_i32_1 = arith.constant 0 : i32
    return %c0_i32, %c0_i32_0 : i32, i32
  }
  func.func @transform_6(%arg0: i32) -> (i32, i32) {
    %c0_i32 = arith.constant 0 : i32
    %c0_i32_0 = arith.constant 0 : i32
    %c0_i32_1 = arith.constant 0 : i32
    return %c0_i32, %c0_i32_0 : i32, i32
  }
  func.func @transform_7(%arg0: i32) -> (i32, i32) {
    %c0_i32 = arith.constant 0 : i32
    %c0_i32_0 = arith.constant 0 : i32
    %c0_i32_1 = arith.constant 0 : i32
    return %c0_i32, %c0_i32_0 : i32, i32
  }
  func.func @transform_8(%arg0: i32) -> (i32, i32) {
    %c0_i32 = arith.constant 0 : i32
    %c0_i32_0 = arith.constant 0 : i32
    return %c0_i32, %arg0 : i32, i32
  }
}

</mosaic_0001>

<llo_original>
// kernel: tpu_custom_call.1
$region0: #{tpu_custom_call.1}
  #allocation0 [shape = 'u32[]', space=smem, size = 0x4, offset = 0x4, fixed_abs, tag = 'smem constant byte address 0x4 - core index']
  #allocation1 [shape = 'u32[144,128]{1,0:T(1,128)}', space=vmem, size = 0x12000, scoped, tag = 'internal scratch']
  #allocation2 [shape = 'f32[8,580]{1,0:T(8,128)}', space=vmem, size = 0x5000, scoped, tag = 'scratch operand']
  #allocation3 [shape = 'f32[8,580]{1,0:T(8,128)}', space=vmem, size = 0x5000, scoped, tag = 'scratch operand']
  #allocation4 [shape = 'f32[72,512]{1,0:T(8,128)}', space=vmem, size = 0x24000, scoped, tag = 'scratch operand']
  #allocation5 [shape = 'f32[72,512]{1,0:T(8,128)}', space=vmem, size = 0x24000, scoped, tag = 'scratch operand']
  %s0 = inlined_call_operand.vmem [shape: f32[2,4,256], index: 0, kind: input, shape index: {}]
  %s1 = inlined_call_operand.vmem [shape: s32[1,256], index: 1, kind: input, shape index: {}]
  %s2 = inlined_call_operand.vmem [shape: f32[8,72], index: 2, kind: input, shape index: {}]
  %s3 = inlined_call_operand.vmem [shape: f32[8,1], index: 3, kind: input, shape index: {}]
  %s4 = inlined_call_operand.vmem [shape: f32[4,72], index: 4, kind: input, shape index: {}]
  %s5 = inlined_call_operand.vmem [shape: f32[4,1], index: 5, kind: input, shape index: {}]
  %s6 = inlined_call_operand.vmem [shape: f32[4,4], index: 6, kind: input, shape index: {}]
  %s7 = inlined_call_operand.vmem [shape: f32[4,1], index: 7, kind: input, shape index: {}]
  %s8 = inlined_call_operand.hbm [shape: f32[4,512], index: 8, kind: output, shape index: {}]
  %s9 = sld [smem:[#allocation0]]
  $region42: #{tpu_custom_call.1} parent=0
    _
  %s11 = ssub.s32 1, %s9
  %s12 = scalar_select 0, %s11, %s9
  $region1: #{tpu_custom_call.1} parent=0
    #allocation6 [shape = 'u8[8192]{0}', space=vmem, size = 0x2000, scoped, tag = 'output window, operand 0, single buffered']
    #allocation7 [shape = 's32[1]{0}', space=sflag, size = 0x4, scoped, tag = 'scoped memory for tpu_custom_call.1']
    %13 = vsyncpa [#allocation7], 0
    // Predicated region
    $region2: #{tpu_custom_call.1} parent=1 // pred_check
      _
    $region3: #{tpu_custom_call.1} parent=1 // pred_check_branch
      %15 = sbr.rel (0) target = $region5
    $region4: #{tpu_custom_call.1} parent=1 // pred_region
      _
    $region5: #{tpu_custom_call.1} parent=1 // pred_fallthru
      _
    // Predicated region
    $region6: #{tpu_custom_call.1} parent=1 // pred_check
      _
    $region7: #{tpu_custom_call.1} parent=1 // pred_check_branch
      %17 = sbr.rel (0) target = $region9
    $region8: #{tpu_custom_call.1} parent=1 // pred_region
      _
    $region9: #{tpu_custom_call.1} parent=1 // pred_fallthru
      _
    // Predicated region
    $region10: #{tpu_custom_call.1} parent=1 // pred_check
      _
    $region11: #{tpu_custom_call.1} parent=1 // pred_check_branch
      %19 = sbr.rel (0) target = $region13
    $region12: #{tpu_custom_call.1} parent=1 // pred_region
      _
    $region13: #{tpu_custom_call.1} parent=1 // pred_fallthru
      _
    // Predicated region
    $region14: #{tpu_custom_call.1} parent=1 // pred_check
      _
    $region15: #{tpu_custom_call.1} parent=1 // pred_check_branch
      %21 = sbr.rel (0) target = $region17
    $region16: #{tpu_custom_call.1} parent=1 // pred_region
      _
    $region17: #{tpu_custom_call.1} parent=1 // pred_fallthru
      _
    // Predicated region
    $region18: #{tpu_custom_call.1} parent=1 // pred_check
      _
    $region19: #{tpu_custom_call.1} parent=1 // pred_check_branch
      %23 = sbr.rel (0) target = $region21
    $region20: #{tpu_custom_call.1} parent=1 // pred_region
      _
    $region21: #{tpu_custom_call.1} parent=1 // pred_fallthru
      _
    // Predicated region
    $region22: #{tpu_custom_call.1} parent=1 // pred_check
      _
    $region23: #{tpu_custom_call.1} parent=1 // pred_check_branch
      %25 = sbr.rel (0) target = $region25
    $region24: #{tpu_custom_call.1} parent=1 // pred_region
      _
    $region25: #{tpu_custom_call.1} parent=1 // pred_fallthru
      _
    // Predicated region
    $region26: #{tpu_custom_call.1} parent=1 // pred_check
      _
    $region27: #{tpu_custom_call.1} parent=1 // pred_check_branch
      %27 = sbr.rel (0) target = $region29
    $region28: #{tpu_custom_call.1} parent=1 // pred_region
      _
    $region29: #{tpu_custom_call.1} parent=1 // pred_fallthru
      _
    // Predicated region
    $region30: #{tpu_custom_call.1} parent=1 // pred_check
      _
    $region31: #{tpu_custom_call.1} parent=1 // pred_check_branch
      %29 = sbr.rel (0) target = $region33
    $region32: #{tpu_custom_call.1} parent=1 // pred_region
      _
    $region33: #{tpu_custom_call.1} parent=1 // pred_fallthru
      _
    %v31 = vld [vmem:[%s1] sm:$0x3]
    %v32 = vadd.s32 %v31, 4294967295
    %vm33 = vcmp.ge.s32.totalorder %v32, 0
    %vm34 = vcmp.lt.s32.totalorder %v32, 16
    %vm35 = vmand %vm33, %vm34
    %v36 = vadd.s32 %v31, 1
    %vm37 = vcmp.ge.s32.totalorder %v36, 0
    %vm38 = vcmp.lt.s32.totalorder %v36, 16
    %vm39 = vmand %vm37, %vm38
    %40 = vst [vmem:[#allocation2] sm:$0xff] 0.0
    %41 = vst [vmem:[#allocation2 + $0x8] sm:$0xff] 0.0
    %42 = vst [vmem:[#allocation2 + $0x10] sm:$0xff] 0.0
    %43 = vst [vmem:[#allocation2 + $0x18] sm:$0xff] 0.0
    %vm44 = vcmask 556032
    %45 = vst.msk [vmem:[#allocation2 + $0x20] sm:$0xff] %vm44, 0.0
    %v46 = vld [vmem:[%s0] sm:$0xff]
    %v47 = vmax.f32 %v46, 0.0
    %v49 = vcombine.high %v47, %v47
    %50 = vrot.lane.b32.xlu0 %v47, 17
    %v51 = vpop.permute.xlu0 %50
    %52 = vrot.lane.b32.xlu0 %v49, 17
    %v53 = vpop.permute.xlu0 %52
    %vm54 = vcmask 138240
    %v55 = vsel %vm54, %v51, %v53
    %vm59 = vcmask 1043592
    %60 = vst.msk [vmem:[#allocation2] sm:$0xf] %vm59, %v51
    %61 = vst [vmem:[#allocation2 + $0x8] sm:$0xf] %v55
    %vm62 = vcmask 134144
    %63 = vst.msk [vmem:[#allocation2 + $0x10] sm:$0xf] %vm62, %v53
    %s64 = scalar_lea.vmem %s0, 8
    %v65 = vld [vmem:[%s64] sm:$0xff]
    %v66 = vmax.f32 %v65, 0.0
    %v68 = vcombine.high %v66, %v66
    %69 = vrot.lane.b32.xlu0 %v66, 51
    %v70 = vpop.permute.xlu0 %69
    %71 = vrot.lane.b32.xlu0 %v68, 51
    %v72 = vpop.permute.xlu0 %71
    %vm73 = vcmask 416768
    %v74 = vsel %vm73, %v70, %v72
    %vm78 = vcmask 1043864
    %79 = vst.msk [vmem:[#allocation2 + $0x10] sm:$0xf] %vm78, %v70
    %80 = vst [vmem:[#allocation2 + $0x18] sm:$0xf] %v74
    %vm81 = vcmask 412672
    %82 = vst.msk [vmem:[#allocation2 + $0x20] sm:$0xf] %vm81, %v72
    %v83 = vld [vmem:[#allocation2] sm:$0xff]
    %v84 = vld [vmem:[#allocation2 + $0x8] sm:$0xff]
    %v85 = vsel %vm35, 1, 0
    %v86 = vlaneseq
    %v87 = vshrl.u32 %v86, 7
    %v88 = vsub.s32 0, %v87
    %v89 = vrot.slane %v85, %v88
    %v90 = vlaneseq
    %v91 = vshrl.u32 %v90, 7
    %v92 = vsub.s32 1, %v91
    %v93 = vrot.slane %v85, %v92
    %vm94 = vcmp.eq.s32.totalorder %v89, 1
    %vm95 = vcmp.eq.s32.totalorder %v93, 1
    %v96 = vsel %vm94, %v83, 0.0
    %v97 = vsel %vm95, %v84, 0.0
    %98 = vst [vmem:[#allocation4] sm:$0xff] %v96
    %99 = vst [vmem:[#allocation4 + $0x8] sm:$0xff] %v97
    %v100 = vld [vmem:[#allocation2 + $0x10] sm:$0xff]
    %v101 = vld [vmem:[#allocation2 + $0x18] sm:$0xff]
    %v102 = vld [vmem:[#allocation2 + $0x20] sm:$0xff]
    %106 = vrot.lane.b32.xlu0 %v100, 94
    %v107 = vpop.permute.xlu0 %106
    %108 = vrot.lane.b32.xlu0 %v101, 94
    %v109 = vpop.permute.xlu0 %108
    %110 = vrot.lane.b32.xlu0 %v102, 94
    %v111 = vpop.permute.xlu0 %110
    %vm112 = vcmask 769024
    %v113 = vsel %vm112, %v107, %v109
    %v114 = vsel %vm112, %v109, %v111
    %v117 = vsel %vm94, %v113, 0.0
    %v118 = vsel %vm95, %v114, 0.0
    %119 = vst [vmem:[#allocation4 + $0x10] sm:$0xff] %v117
    %120 = vst [vmem:[#allocation4 + $0x18] sm:$0xff] %v118
    %v121 = vld [vmem:[#allocation2] sm:$0xff]
    %v122 = vld [vmem:[#allocation2 + $0x8] sm:$0xff]
    %v123 = vld [vmem:[#allocation2 + $0x10] sm:$0xff]
    %127 = vrot.lane.b32.xlu0 %v121, 127
    %v128 = vpop.permute.xlu0 %127
    %129 = vrot.lane.b32.xlu0 %v122, 127
    %v130 = vpop.permute.xlu0 %129
    %131 = vrot.lane.b32.xlu0 %v123, 127
    %v132 = vpop.permute.xlu0 %131
    %vm133 = vcmask 1039360
    %v134 = vsel %vm133, %v128, %v130
    %v135 = vsel %vm133, %v130, %v132
    %138 = vst [vmem:[#allocation4 + $0x20] sm:$0xff] %v134
    %139 = vst [vmem:[#allocation4 + $0x28] sm:$0xff] %v135
    %v140 = vld [vmem:[#allocation2 + $0x10] sm:$0xff]
    %v141 = vld [vmem:[#allocation2 + $0x18] sm:$0xff]
    %v142 = vld [vmem:[#allocation2 + $0x20] sm:$0xff]
    %146 = vrot.lane.b32.xlu0 %v140, 93
    %v147 = vpop.permute.xlu0 %146
    %148 = vrot.lane.b32.xlu0 %v141, 93
    %v149 = vpop.permute.xlu0 %148
    %150 = vrot.lane.b32.xlu0 %v142, 93
    %v151 = vpop.permute.xlu0 %150
    %vm152 = vcmask 760832
    %v153 = vsel %vm152, %v147, %v149
    %v154 = vsel %vm152, %v149, %v151
    %157 = vst [vmem:[#allocation4 + $0x30] sm:$0xff] %v153
    %158 = vst [vmem:[#allocation4 + $0x38] sm:$0xff] %v154
    %v159 = vld [vmem:[#allocation2] sm:$0xff]
    %v160 = vld [vmem:[#allocation2 + $0x8] sm:$0xff]
    %v161 = vld [vmem:[#allocation2 + $0x10] sm:$0xff]
    %v162 = vsel %vm39, 1, 0
    %v163 = vlaneseq
    %v164 = vshrl.u32 %v163, 7
    %v165 = vsub.s32 0, %v164
    %v166 = vrot.slane %v162, %v165
    %v167 = vlaneseq
    %v168 = vshrl.u32 %v167, 7
    %v169 = vsub.s32 1, %v168
    %v170 = vrot.slane %v162, %v169
    %vm171 = vcmp.eq.s32.totalorder %v166, 1
    %vm172 = vcmp.eq.s32.totalorder %v170, 1
    %176 = vrot.lane.b32.xlu0 %v159, 126
    %v177 = vpop.permute.xlu0 %176
    %178 = vrot.lane.b32.xlu0 %v160, 126
    %v179 = vpop.permute.xlu0 %178
    %180 = vrot.lane.b32.xlu0 %v161, 126
    %v181 = vpop.permute.xlu0 %180
    %vm182 = vcmask 1031168
    %v183 = vsel %vm182, %v177, %v179
    %v184 = vsel %vm182, %v179, %v181
    %v187 = vsel %vm171, %v183, 0.0
    %v188 = vsel %vm172, %v184, 0.0
    %189 = vst [vmem:[#allocation4 + $0x40] sm:$0xff] %v187
    %190 = vst [vmem:[#allocation4 + $0x48] sm:$0xff] %v188
    %v191 = vld [vmem:[#allocation2 + $0x10] sm:$0xff]
    %v192 = vld [vmem:[#allocation2 + $0x18] sm:$0xff]
    %v193 = vld [vmem:[#allocation2 + $0x20] sm:$0xff]
    %197 = vrot.lane.b32.xlu0 %v191, 92
    %v198 = vpop.permute.xlu0 %197
    %199 = vrot.lane.b32.xlu0 %v192, 92
    %v200 = vpop.permute.xlu0 %199
    %201 = vrot.lane.b32.xlu0 %v193, 92
    %v202 = vpop.permute.xlu0 %201
    %vm203 = vcmask 752640
    %v204 = vsel %vm203, %v198, %v200
    %v205 = vsel %vm203, %v200, %v202
    %v208 = vsel %vm171, %v204, 0.0
    %v209 = vsel %vm172, %v205, 0.0
    %210 = vst [vmem:[#allocation4 + $0x50] sm:$0xff] %v208
    %211 = vst [vmem:[#allocation4 + $0x58] sm:$0xff] %v209
    %v212 = vld [vmem:[#allocation2] sm:$0xff]
    %v213 = vld [vmem:[#allocation2 + $0x8] sm:$0xff]
    %v214 = vld [vmem:[#allocation2 + $0x10] sm:$0xff]
    %218 = vrot.lane.b32.xlu0 %v212, 112
    %v219 = vpop.permute.xlu0 %218
    %220 = vrot.lane.b32.xlu0 %v213, 112
    %v221 = vpop.permute.xlu0 %220
    %222 = vrot.lane.b32.xlu0 %v214, 112
    %v223 = vpop.permute.xlu0 %222
    %vm224 = vcmask 916480
    %v225 = vsel %vm224, %v219, %v221
    %v226 = vsel %vm224, %v221, %v223
    %v229 = vsel %vm94, %v225, 0.0
    %v230 = vsel %vm95, %v226, 0.0
    %231 = vst [vmem:[#allocation4 + $0x60] sm:$0xff] %v229
    %232 = vst [vmem:[#allocation4 + $0x68] sm:$0xff] %v230
    %v233 = vld [vmem:[#allocation2 + $0x10] sm:$0xff]
    %v234 = vld [vmem:[#allocation2 + $0x18] sm:$0xff]
    %v235 = vld [vmem:[#allocation2 + $0x20] sm:$0xff]
    %239 = vrot.lane.b32.xlu0 %v233, 78
    %v240 = vpop.permute.xlu0 %239
    %241 = vrot.lane.b32.xlu0 %v234, 78
    %v242 = vpop.permute.xlu0 %241
    %243 = vrot.lane.b32.xlu0 %v235, 78
    %v244 = vpop.permute.xlu0 %243
    %vm245 = vcmask 637952
    %v246 = vsel %vm245, %v240, %v242
    %v247 = vsel %vm245, %v242, %v244
    %v250 = vsel %vm94, %v246, 0.0
    %v251 = vsel %vm95, %v247, 0.0
    %252 = vst [vmem:[#allocation4 + $0x70] sm:$0xff] %v250
    %253 = vst [vmem:[#allocation4 + $0x78] sm:$0xff] %v251
    %v254 = vld [vmem:[#allocation2] sm:$0xff]
    %v255 = vld [vmem:[#allocation2 + $0x8] sm:$0xff]
    %v256 = vld [vmem:[#allocation2 + $0x10] sm:$0xff]
    %260 = vrot.lane.b32.xlu0 %v254, 111
    %v261 = vpop.permute.xlu0 %260
    %262 = vrot.lane.b32.xlu0 %v255, 111
    %v263 = vpop.permute.xlu0 %262
    %264 = vrot.lane.b32.xlu0 %v256, 111
    %v265 = vpop.permute.xlu0 %264
    %vm266 = vcmask 908288
    %v267 = vsel %vm266, %v261, %v263
    %v268 = vsel %vm266, %v263, %v265
    %271 = vst [vmem:[#allocation4 + $0x80] sm:$0xff] %v267
    %272 = vst [vmem:[#allocation4 + $0x88] sm:$0xff] %v268
    %v273 = vld [vmem:[#allocation2 + $0x10] sm:$0xff]
    %v274 = vld [vmem:[#allocation2 + $0x18] sm:$0xff]
    %v275 = vld [vmem:[#allocation2 + $0x20] sm:$0xff]
    %279 = vrot.lane.b32.xlu0 %v273, 77
    %v280 = vpop.permute.xlu0 %279
    %281 = vrot.lane.b32.xlu0 %v274, 77
    %v282 = vpop.permute.xlu0 %281
    %283 = vrot.lane.b32.xlu0 %v275, 77
    %v284 = vpop.permute.xlu0 %283
    %vm285 = vcmask 629760
    %v286 = vsel %vm285, %v280, %v282
    %v287 = vsel %vm285, %v282, %v284
    %290 = vst [vmem:[#allocation4 + $0x90] sm:$0xff] %v286
    %291 = vst [vmem:[#allocation4 + $0x98] sm:$0xff] %v287
    %v292 = vld [vmem:[#allocation2] sm:$0xff]
    %v293 = vld [vmem:[#allocation2 + $0x8] sm:$0xff]
    %v294 = vld [vmem:[#allocation2 + $0x10] sm:$0xff]
    %298 = vrot.lane.b32.xlu0 %v292, 110
    %v299 = vpop.permute.xlu0 %298
    %300 = vrot.lane.b32.xlu0 %v293, 110
    %v301 = vpop.permute.xlu0 %300
    %302 = vrot.lane.b32.xlu0 %v294, 110
    %v303 = vpop.permute.xlu0 %302
    %vm304 = vcmask 900096
    %v305 = vsel %vm304, %v299, %v301
    %v306 = vsel %vm304, %v301, %v303
    %v309 = vsel %vm171, %v305, 0.0
    %v310 = vsel %vm172, %v306, 0.0
    %311 = vst [vmem:[#allocation4 + $0xa0] sm:$0xff] %v309
    %312 = vst [vmem:[#allocation4 + $0xa8] sm:$0xff] %v310
    %v313 = vld [vmem:[#allocation2 + $0x10] sm:$0xff]
    %v314 = vld [vmem:[#allocation2 + $0x18] sm:$0xff]
    %v315 = vld [vmem:[#allocation2 + $0x20] sm:$0xff]
    %319 = vrot.lane.b32.xlu0 %v313, 76
    %v320 = vpop.permute.xlu0 %319
    %321 = vrot.lane.b32.xlu0 %v314, 76
    %v322 = vpop.permute.xlu0 %321
    %323 = vrot.lane.b32.xlu0 %v315, 76
    %v324 = vpop.permute.xlu0 %323
    %vm325 = vcmask 621568
    %v326 = vsel %vm325, %v320, %v322
    %v327 = vsel %vm325, %v322, %v324
    %v330 = vsel %vm171, %v326, 0.0
    %v331 = vsel %vm172, %v327, 0.0
    %332 = vst [vmem:[#allocation4 + $0xb0] sm:$0xff] %v330
    %333 = vst [vmem:[#allocation4 + $0xb8] sm:$0xff] %v331
    %v334 = vld [vmem:[#allocation2] sm:$0xff]
    %v335 = vld [vmem:[#allocation2 + $0x8] sm:$0xff]
    %v336 = vld [vmem:[#allocation2 + $0x10] sm:$0xff]
    %340 = vrot.lane.b32.xlu0 %v334, 96
    %v341 = vpop.permute.xlu0 %340
    %342 = vrot.lane.b32.xlu0 %v335, 96
    %v343 = vpop.permute.xlu0 %342
    %344 = vrot.lane.b32.xlu0 %v336, 96
    %v345 = vpop.permute.xlu0 %344
    %vm346 = vcmask 785408
    %v347 = vsel %vm346, %v341, %v343
    %v348 = vsel %vm346, %v343, %v345
    %v351 = vsel %vm94, %v347, 0.0
    %v352 = vsel %vm95, %v348, 0.0
    %353 = vst [vmem:[#allocation4 + $0xc0] sm:$0xff] %v351
    %354 = vst [vmem:[#allocation4 + $0xc8] sm:$0xff] %v352
    %v355 = vld [vmem:[#allocation2 + $0x10] sm:$0xff]
    %v356 = vld [vmem:[#allocation2 + $0x18] sm:$0xff]
    %v357 = vld [vmem:[#allocation2 + $0x20] sm:$0xff]
    %361 = vrot.lane.b32.xlu0 %v355, 62
    %v362 = vpop.permute.xlu0 %361
    %363 = vrot.lane.b32.xlu0 %v356, 62
    %v364 = vpop.permute.xlu0 %363
    %365 = vrot.lane.b32.xlu0 %v357, 62
    %v366 = vpop.permute.xlu0 %365
    %vm367 = vcmask 506880
    %v368 = vsel %vm367, %v362, %v364
    %v369 = vsel %vm367, %v364, %v366
    %v372 = vsel %vm94, %v368, 0.0
    %v373 = vsel %vm95, %v369, 0.0
    %374 = vst [vmem:[#allocation4 + $0xd0] sm:$0xff] %v372
    %375 = vst [vmem:[#allocation4 + $0xd8] sm:$0xff] %v373
    %v376 = vld [vmem:[#allocation2] sm:$0xff]
    %v377 = vld [vmem:[#allocation2 + $0x8] sm:$0xff]
    %v378 = vld [vmem:[#allocation2 + $0x10] sm:$0xff]
    %382 = vrot.lane.b32.xlu0 %v376, 95
    %v383 = vpop.permute.xlu0 %382
    %384 = vrot.lane.b32.xlu0 %v377, 95
    %v385 = vpop.permute.xlu0 %384
    %386 = vrot.lane.b32.xlu0 %v378, 95
    %v387 = vpop.permute.xlu0 %386
    %vm388 = vcmask 777216
    %v389 = vsel %vm388, %v383, %v385
    %v390 = vsel %vm388, %v385, %v387
    %393 = vst [vmem:[#allocation4 + $0xe0] sm:$0xff] %v389
    %394 = vst [vmem:[#allocation4 + $0xe8] sm:$0xff] %v390
    %v395 = vld [vmem:[#allocation2 + $0x10] sm:$0xff]
    %v396 = vld [vmem:[#allocation2 + $0x18] sm:$0xff]
    %v397 = vld [vmem:[#allocation2 + $0x20] sm:$0xff]
    %401 = vrot.lane.b32.xlu0 %v395, 61
    %v402 = vpop.permute.xlu0 %401
    %403 = vrot.lane.b32.xlu0 %v396, 61
    %v404 = vpop.permute.xlu0 %403
    %405 = vrot.lane.b32.xlu0 %v397, 61
    %v406 = vpop.permute.xlu0 %405
    %vm407 = vcmask 498688
    %v408 = vsel %vm407, %v402, %v404
    %v409 = vsel %vm407, %v404, %v406
    %412 = vst [vmem:[#allocation4 + $0xf0] sm:$0xff] %v408
    %413 = vst [vmem:[#allocation4 + $0xf8] sm:$0xff] %v409
    %v414 = vld [vmem:[#allocation2] sm:$0xff]
    %v415 = vld [vmem:[#allocation2 + $0x8] sm:$0xff]
    %v416 = vld [vmem:[#allocation2 + $0x10] sm:$0xff]
    %420 = vrot.lane.b32.xlu0 %v414, 94
    %v421 = vpop.permute.xlu0 %420
    %422 = vrot.lane.b32.xlu0 %v415, 94
    %v423 = vpop.permute.xlu0 %422
    %424 = vrot.lane.b32.xlu0 %v416, 94
    %v425 = vpop.permute.xlu0 %424
    %v426 = vsel %vm112, %v421, %v423
    %v427 = vsel %vm112, %v423, %v425
    %v430 = vsel %vm171, %v426, 0.0
    %v431 = vsel %vm172, %v427, 0.0
    %432 = vst [vmem:[#allocation4 + $0x100] sm:$0xff] %v430
    %433 = vst [vmem:[#allocation4 + $0x108] sm:$0xff] %v431
    %v434 = vld [vmem:[#allocation2 + $0x10] sm:$0xff]
    %v435 = vld [vmem:[#allocation2 + $0x18] sm:$0xff]
    %v436 = vld [vmem:[#allocation2 + $0x20] sm:$0xff]
    %440 = vrot.lane.b32.xlu0 %v434, 60
    %v441 = vpop.permute.xlu0 %440
    %442 = vrot.lane.b32.xlu0 %v435, 60
    %v443 = vpop.permute.xlu0 %442
    %444 = vrot.lane.b32.xlu0 %v436, 60
    %v445 = vpop.permute.xlu0 %444
    %vm446 = vcmask 490496
    %v447 = vsel %vm446, %v441, %v443
    %v448 = vsel %vm446, %v443, %v445
    %v451 = vsel %vm171, %v447, 0.0
    %v452 = vsel %vm172, %v448, 0.0
    %453 = vst [vmem:[#allocation4 + $0x110] sm:$0xff] %v451
    %454 = vst [vmem:[#allocation4 + $0x118] sm:$0xff] %v452
    %v455 = vld [vmem:[%s2] sm:$0xff]
    %v456 = vld [vmem:[#allocation4] sm:$0xff]
    %v457 = vld [vmem:[#allocation4 + $0x8] sm:$0xff]
    %v458 = vld [vmem:[#allocation4 + $0x10] sm:$0xff]
    %v459 = vld [vmem:[#allocation4 + $0x18] sm:$0xff]
    %v460 = vld [vmem:[#allocation4 + $0x20] sm:$0xff]
    %v461 = vld [vmem:[#allocation4 + $0x28] sm:$0xff]
    %v462 = vld [vmem:[#allocation4 + $0x30] sm:$0xff]
    %v463 = vld [vmem:[#allocation4 + $0x38] sm:$0xff]
    %v464 = vld [vmem:[#allocation4 + $0x40] sm:$0xff]
    %v465 = vld [vmem:[#allocation4 + $0x48] sm:$0xff]
    %v466 = vld [vmem:[#allocation4 + $0x50] sm:$0xff]
    %v467 = vld [vmem:[#allocation4 + $0x58] sm:$0xff]
    %v468 = vld [vmem:[#allocation4 + $0x60] sm:$0xff]
    %v469 = vld [vmem:[#allocation4 + $0x68] sm:$0xff]
    %v470 = vld [vmem:[#allocation4 + $0x70] sm:$0xff]
    %v471 = vld [vmem:[#allocation4 + $0x78] sm:$0xff]
    %v472 = vld [vmem:[#allocation4 + $0x80] sm:$0xff]
    %v473 = vld [vmem:[#allocation4 + $0x88] sm:$0xff]
    %v474 = vld [vmem:[#allocation4 + $0x90] sm:$0xff]
    %v475 = vld [vmem:[#allocation4 + $0x98] sm:$0xff]
    %v476 = vld [vmem:[#allocation4 + $0xa0] sm:$0xff]
    %v477 = vld [vmem:[#allocation4 + $0xa8] sm:$0xff]
    %v478 = vld [vmem:[#allocation4 + $0xb0] sm:$0xff]
    %v479 = vld [vmem:[#allocation4 + $0xb8] sm:$0xff]
    %v480 = vld [vmem:[#allocation4 + $0xc0] sm:$0xff]
    %v481 = vld [vmem:[#allocation4 + $0xc8] sm:$0xff]
    %v482 = vld [vmem:[#allocation4 + $0xd0] sm:$0xff]
    %v483 = vld [vmem:[#allocation4 + $0xd8] sm:$0xff]
    %v484 = vld [vmem:[#allocation4 + $0xe0] sm:$0xff]
    %v485 = vld [vmem:[#allocation4 + $0xe8] sm:$0xff]
    %v486 = vld [vmem:[#allocation4 + $0xf0] sm:$0xff]
    %v487 = vld [vmem:[#allocation4 + $0xf8] sm:$0xff]
    %v488 = vld [vmem:[#allocation4 + $0x100] sm:$0xff]
    %v489 = vld [vmem:[#allocation4 + $0x108] sm:$0xff]
    %v490 = vld [vmem:[#allocation4 + $0x110] sm:$0xff]
    %v491 = vld [vmem:[#allocation4 + $0x118] sm:$0xff]
    %v492 = vpack.c.bf16 %v455, %v455
    %v493 = vunpack.c.l.bf16 %v492
    %v494 = vsub.f32 %v455, %v493
    %v495 = vpack.c.bf16 %v494, %v494
    %v496 = vpack.c.bf16 %v460, %v456
    %v497 = vpack.c.bf16 %v461, %v457
    %v498 = vpack.c.bf16 %v462, %v458
    %v499 = vpack.c.bf16 %v463, %v459
    %v500 = vpack.c.bf16 %v468, %v464
    %v501 = vpack.c.bf16 %v469, %v465
    %v502 = vpack.c.bf16 %v470, %v466
    %v503 = vpack.c.bf16 %v471, %v467
    %v504 = vpack.c.bf16 %v476, %v472
    %v505 = vpack.c.bf16 %v477, %v473
    %v506 = vpack.c.bf16 %v478, %v474
    %v507 = vpack.c.bf16 %v479, %v475
    %v508 = vpack.c.bf16 %v484, %v480
    %v509 = vpack.c.bf16 %v485, %v481
    %v510 = vpack.c.bf16 %v486, %v482
    %v511 = vpack.c.bf16 %v487, %v483
    %v512 = vpack.c.bf16 %v488, %v488
    %v513 = vpack.c.bf16 %v489, %v489
    %v514 = vpack.c.bf16 %v490, %v490
    %v515 = vpack.c.bf16 %v491, %v491
    %v516 = vunpack.c.l.bf16 %v496
    %v517 = vunpack.c.l.bf16 %v497
    %v518 = vunpack.c.l.bf16 %v498
    %v519 = vunpack.c.l.bf16 %v499
    %v520 = vunpack.c.h.bf16 %v496
    %v521 = vunpack.c.h.bf16 %v497
    %v522 = vunpack.c.h.bf16 %v498
    %v523 = vunpack.c.h.bf16 %v499
    %v524 = vunpack.c.l.bf16 %v500
    %v525 = vunpack.c.l.bf16 %v501
    %v526 = vunpack.c.l.bf16 %v502
    %v527 = vunpack.c.l.bf16 %v503
    %v528 = vunpack.c.h.bf16 %v500
    %v529 = vunpack.c.h.bf16 %v501
    %v530 = vunpack.c.h.bf16 %v502
    %v531 = vunpack.c.h.bf16 %v503
    %v532 = vunpack.c.l.bf16 %v504
    %v533 = vunpack.c.l.bf16 %v505
    %v534 = vunpack.c.l.bf16 %v506
    %v535 = vunpack.c.l.bf16 %v507
    %v536 = vunpack.c.h.bf16 %v504
    %v537 = vunpack.c.h.bf16 %v505
    %v538 = vunpack.c.h.bf16 %v506
    %v539 = vunpack.c.h.bf16 %v507
    %v540 = vunpack.c.l.bf16 %v508
    %v541 = vunpack.c.l.bf16 %v509
    %v542 = vunpack.c.l.bf16 %v510
    %v543 = vunpack.c.l.bf16 %v511
    %v544 = vunpack.c.h.bf16 %v508
    %v545 = vunpack.c.h.bf16 %v509
    %v546 = vunpack.c.h.bf16 %v510
    %v547 = vunpack.c.h.bf16 %v511
    %v548 = vunpack.c.l.bf16 %v512
    %v549 = vunpack.c.l.bf16 %v513
    %v550 = vunpack.c.l.bf16 %v514
    %v551 = vunpack.c.l.bf16 %v515
    %v552 = vsub.f32 %v456, %v516
    %v553 = vsub.f32 %v457, %v517
    %v554 = vsub.f32 %v458, %v518
    %v555 = vsub.f32 %v459, %v519
    %v556 = vsub.f32 %v460, %v520
    %v557 = vsub.f32 %v461, %v521
    %v558 = vsub.f32 %v462, %v522
    %v559 = vsub.f32 %v463, %v523
    %v560 = vsub.f32 %v464, %v524
    %v561 = vsub.f32 %v465, %v525
    %v562 = vsub.f32 %v466, %v526
    %v563 = vsub.f32 %v467, %v527
    %v564 = vsub.f32 %v468, %v528
    %v565 = vsub.f32 %v469, %v529
    %v566 = vsub.f32 %v470, %v530
    %v567 = vsub.f32 %v471, %v531
    %v568 = vsub.f32 %v472, %v532
    %v569 = vsub.f32 %v473, %v533
    %v570 = vsub.f32 %v474, %v534
    %v571 = vsub.f32 %v475, %v535
    %v572 = vsub.f32 %v476, %v536
    %v573 = vsub.f32 %v477, %v537
    %v574 = vsub.f32 %v478, %v538
    %v575 = vsub.f32 %v479, %v539
    %v576 = vsub.f32 %v480, %v540
    %v577 = vsub.f32 %v481, %v541
    %v578 = vsub.f32 %v482, %v542
    %v579 = vsub.f32 %v483, %v543
    %v580 = vsub.f32 %v484, %v544
    %v581 = vsub.f32 %v485, %v545
    %v582 = vsub.f32 %v486, %v546
    %v583 = vsub.f32 %v487, %v547
    %v584 = vsub.f32 %v488, %v548
    %v585 = vsub.f32 %v489, %v549
    %v586 = vsub.f32 %v490, %v550
    %v587 = vsub.f32 %v491, %v551
    %v588 = vpack.c.bf16 %v556, %v552
    %v589 = vpack.c.bf16 %v557, %v553
    %v590 = vpack.c.bf16 %v558, %v554
    %v591 = vpack.c.bf16 %v559, %v555
    %v592 = vpack.c.bf16 %v564, %v560
    %v593 = vpack.c.bf16 %v565, %v561
    %v594 = vpack.c.bf16 %v566, %v562
    %v595 = vpack.c.bf16 %v567, %v563
    %v596 = vpack.c.bf16 %v572, %v568
    %v597 = vpack.c.bf16 %v573, %v569
    %v598 = vpack.c.bf16 %v574, %v570
    %v599 = vpack.c.bf16 %v575, %v571
    %v600 = vpack.c.bf16 %v580, %v576
    %v601 = vpack.c.bf16 %v581, %v577
    %v602 = vpack.c.bf16 %v582, %v578
    %v603 = vpack.c.bf16 %v583, %v579
    %v604 = vpack.c.bf16 %v584, %v584
    %v605 = vpack.c.bf16 %v585, %v585
    %v606 = vpack.c.bf16 %v586, %v586
    %v607 = vpack.c.bf16 %v587, %v587
    %vm608 = vcmask 588800
    %v610 = vsel %vm608, %v495, 0
    %vm612 = vcmask 1043456
    %v614 = vsel %vm612, %v512, 0
    %v617 = vsel %vm612, %v513, 0
    %v620 = vsel %vm612, %v514, 0
    %v623 = vsel %vm612, %v515, 0
    %625 = vmatprep.subr.bf16.mxu0 %v497
    %626 = vmatpush1.bf16.msra.mxu0 %v496
    %627 = vmatprep.subr.bf16.mxu0 %v501
    %628 = vmatpush1.bf16.msra.mxu0 %v500
    %629 = vmatprep.subr.bf16.mxu0 %v505
    %630 = vmatpush1.bf16.msra.mxu0 %v504
    %631 = vmatprep.subr.bf16.mxu0 %v509
    %632 = vmatpush1.bf16.msra.mxu0 %v508
    %633 = vmatprep.subr.bf16.mxu0 %v617
    %634 = vmatpush1.bf16.msra.mxu0 %v614
    %635 = vmatprep.subr.bf16.mxu0 0
    %636 = vmatpush1.bf16.msra.mxu0 0
    %637 = vmatprep.subr.bf16.mxu0 0
    %638 = vmatpush1.bf16.msra.mxu0 0
    %639 = vmatprep.subr.bf16.mxu0 0
    %640 = vmatpush1.bf16.msra.mxu0 0
    %641 = vmatprep.subr.bf16.mxu0 0
    %642 = vmatpush1.bf16.msra.mxu0 0
    %643 = vmatprep.subr.bf16.mxu0 0
    %644 = vmatpush1.bf16.msra.mxu0 0
    %645 = vmatprep.subr.bf16.mxu0 0
    %646 = vmatpush1.bf16.msra.mxu0 0
    %647 = vmatprep.subr.bf16.mxu0 0
    %648 = vmatpush1.bf16.msra.mxu0 0
    %649 = vmatprep.subr.bf16.mxu0 0
    %650 = vmatpush1.bf16.msra.mxu0 0
    %651 = vmatprep.subr.bf16.mxu0 0
    %652 = vmatpush1.bf16.msra.mxu0 0
    %653 = vmatprep.subr.bf16.mxu0 0
    %654 = vmatpush1.bf16.msra.mxu0 0
    %655 = vmatprep.subr.bf16.mxu0 0
    %656 = vmatpush1.bf16.msra.mxu0 0
    %657 = vmatprep.mubr.bf16.mxu0 0
    %658 = vmatmul.mubr.bf16.gmra.mrb[0].mxu0 %v610
    %v659 = vpop.f32.mrb[0].mxu0
    %v660 = vadd.f32 0.0, %v659
    %v661 = vpop.f32.mrb[0].mxu0
    %v662 = vadd.f32 0.0, %v661
    %v663 = vpop.f32.mrb[0].mxu0
    %v664 = vpop.f32.mrb[0].mxu0
    %665 = vdwg.mxu0
    %666 = vmatprep.subr.bf16.mxu0 %v499
    %667 = vmatpush1.bf16.msra.mxu0 %v498
    %668 = vmatprep.subr.bf16.mxu0 %v503
    %669 = vmatpush1.bf16.msra.mxu0 %v502
    %670 = vmatprep.subr.bf16.mxu0 %v507
    %671 = vmatpush1.bf16.msra.mxu0 %v506
    %672 = vmatprep.subr.bf16.mxu0 %v511
    %673 = vmatpush1.bf16.msra.mxu0 %v510
    %674 = vmatprep.subr.bf16.mxu0 %v623
    %675 = vmatpush1.bf16.msra.mxu0 %v620
    %676 = vmatprep.subr.bf16.mxu0 0
    %677 = vmatpush1.bf16.msra.mxu0 0
    %678 = vmatprep.subr.bf16.mxu0 0
    %679 = vmatpush1.bf16.msra.mxu0 0
    %680 = vmatprep.subr.bf16.mxu0 0
    %681 = vmatpush1.bf16.msra.mxu0 0
    %682 = vmatprep.subr.bf16.mxu0 0
    %683 = vmatpush1.bf16.msra.mxu0 0
    %684 = vmatprep.subr.bf16.mxu0 0
    %685 = vmatpush1.bf16.msra.mxu0 0
    %686 = vmatprep.subr.bf16.mxu0 0
    %687 = vmatpush1.bf16.msra.mxu0 0
    %688 = vmatprep.subr.bf16.mxu0 0
    %689 = vmatpush1.bf16.msra.mxu0 0
    %690 = vmatprep.subr.bf16.mxu0 0
    %691 = vmatpush1.bf16.msra.mxu0 0
    %692 = vmatprep.subr.bf16.mxu0 0
    %693 = vmatpush1.bf16.msra.mxu0 0
    %694 = vmatprep.subr.bf16.mxu0 0
    %695 = vmatpush1.bf16.msra.mxu0 0
    %696 = vmatprep.subr.bf16.mxu0 0
    %697 = vmatpush1.bf16.msra.mxu0 0
    %698 = vmatprep.mubr.bf16.mxu0 0
    %699 = vmatmul.mubr.bf16.gmra.mrb[0].mxu0 %v610
    %v700 = vpop.f32.mrb[0].mxu0
    %v701 = vadd.f32 0.0, %v700
    %v702 = vpop.f32.mrb[0].mxu0
    %v703 = vadd.f32 0.0, %v702
    %v704 = vpop.f32.mrb[0].mxu0
    %v705 = vpop.f32.mrb[0].mxu0
    %706 = vdwg.mxu0
    %v708 = vsel %vm608, %v492, 0
    %710 = vmatprep.subr.bf16.mxu0 %v497
    %711 = vmatpush1.bf16.msra.mxu0 %v496
    %712 = vmatprep.subr.bf16.mxu0 %v501
    %713 = vmatpush1.bf16.msra.mxu0 %v500
    %714 = vmatprep.subr.bf16.mxu0 %v505
    %715 = vmatpush1.bf16.msra.mxu0 %v504
    %716 = vmatprep.subr.bf16.mxu0 %v509
    %717 = vmatpush1.bf16.msra.mxu0 %v508
    %718 = vmatprep.subr.bf16.mxu0 %v617
    %719 = vmatpush1.bf16.msra.mxu0 %v614
    %720 = vmatprep.subr.bf16.mxu0 0
    %721 = vmatpush1.bf16.msra.mxu0 0
    %722 = vmatprep.subr.bf16.mxu0 0
    %723 = vmatpush1.bf16.msra.mxu0 0
    %724 = vmatprep.subr.bf16.mxu0 0
    %725 = vmatpush1.bf16.msra.mxu0 0
    %726 = vmatprep.subr.bf16.mxu0 0
    %727 = vmatpush1.bf16.msra.mxu0 0
    %728 = vmatprep.subr.bf16.mxu0 0
    %729 = vmatpush1.bf16.msra.mxu0 0
    %730 = vmatprep.subr.bf16.mxu0 0
    %731 = vmatpush1.bf16.msra.mxu0 0
    %732 = vmatprep.subr.bf16.mxu0 0
    %733 = vmatpush1.bf16.msra.mxu0 0
    %734 = vmatprep.subr.bf16.mxu0 0
    %735 = vmatpush1.bf16.msra.mxu0 0
    %736 = vmatprep.subr.bf16.mxu0 0
    %737 = vmatpush1.bf16.msra.mxu0 0
    %738 = vmatprep.subr.bf16.mxu0 0
    %739 = vmatpush1.bf16.msra.mxu0 0
    %740 = vmatprep.subr.bf16.mxu0 0
    %741 = vmatpush1.bf16.msra.mxu0 0
    %742 = vmatprep.mubr.bf16.mxu0 0
    %743 = vmatmul.mubr.bf16.gmra.mrb[0].mxu0 %v708
    %v744 = vpop.f32.mrb[0].mxu0
    %v745 = vadd.f32 %v660, %v744
    %v746 = vpop.f32.mrb[0].mxu0
    %v747 = vadd.f32 %v662, %v746
    %v748 = vpop.f32.mrb[0].mxu0
    %v749 = vpop.f32.mrb[0].mxu0
    %750 = vdwg.mxu0
    %751 = vmatprep.subr.bf16.mxu0 %v499
    %752 = vmatpush1.bf16.msra.mxu0 %v498
    %753 = vmatprep.subr.bf16.mxu0 %v503
    %754 = vmatpush1.bf16.msra.mxu0 %v502
    %755 = vmatprep.subr.bf16.mxu0 %v507
    %756 = vmatpush1.bf16.msra.mxu0 %v506
    %757 = vmatprep.subr.bf16.mxu0 %v511
    %758 = vmatpush1.bf16.msra.mxu0 %v510
    %759 = vmatprep.subr.bf16.mxu0 %v623
    %760 = vmatpush1.bf16.msra.mxu0 %v620
    %761 = vmatprep.subr.bf16.mxu0 0
    %762 = vmatpush1.bf16.msra.mxu0 0
    %763 = vmatprep.subr.bf16.mxu0 0
    %764 = vmatpush1.bf16.msra.mxu0 0
    %765 = vmatprep.subr.bf16.mxu0 0
    %766 = vmatpush1.bf16.msra.mxu0 0
    %767 = vmatprep.subr.bf16.mxu0 0
    %768 = vmatpush1.bf16.msra.mxu0 0
    %769 = vmatprep.subr.bf16.mxu0 0
    %770 = vmatpush1.bf16.msra.mxu0 0
    %771 = vmatprep.subr.bf16.mxu0 0
    %772 = vmatpush1.bf16.msra.mxu0 0
    %773 = vmatprep.subr.bf16.mxu0 0
    %774 = vmatpush1.bf16.msra.mxu0 0
    %775 = vmatprep.subr.bf16.mxu0 0
    %776 = vmatpush1.bf16.msra.mxu0 0
    %777 = vmatprep.subr.bf16.mxu0 0
    %778 = vmatpush1.bf16.msra.mxu0 0
    %779 = vmatprep.subr.bf16.mxu0 0
    %780 = vmatpush1.bf16.msra.mxu0 0
    %781 = vmatprep.subr.bf16.mxu0 0
    %782 = vmatpush1.bf16.msra.mxu0 0
    %783 = vmatprep.mubr.bf16.mxu0 0
    %784 = vmatmul.mubr.bf16.gmra.mrb[0].mxu0 %v708
    %v785 = vpop.f32.mrb[0].mxu0
    %v786 = vadd.f32 %v701, %v785
    %v787 = vpop.f32.mrb[0].mxu0
    %v788 = vadd.f32 %v703, %v787
    %v789 = vpop.f32.mrb[0].mxu0
    %v790 = vpop.f32.mrb[0].mxu0
    %791 = vdwg.mxu0
    %v793 = vsel %vm612, %v604, 0
    %v796 = vsel %vm612, %v605, 0
    %v799 = vsel %vm612, %v606, 0
    %v802 = vsel %vm612, %v607, 0
    %804 = vmatprep.subr.bf16.mxu0 %v589
    %805 = vmatpush1.bf16.msra.mxu0 %v588
    %806 = vmatprep.subr.bf16.mxu0 %v593
    %807 = vmatpush1.bf16.msra.mxu0 %v592
    %808 = vmatprep.subr.bf16.mxu0 %v597
    %809 = vmatpush1.bf16.msra.mxu0 %v596
    %810 = vmatprep.subr.bf16.mxu0 %v601
    %811 = vmatpush1.bf16.msra.mxu0 %v600
    %812 = vmatprep.subr.bf16.mxu0 %v796
    %813 = vmatpush1.bf16.msra.mxu0 %v793
    %814 = vmatprep.subr.bf16.mxu0 0
    %815 = vmatpush1.bf16.msra.mxu0 0
    %816 = vmatprep.subr.bf16.mxu0 0
    %817 = vmatpush1.bf16.msra.mxu0 0
    %818 = vmatprep.subr.bf16.mxu0 0
    %819 = vmatpush1.bf16.msra.mxu0 0
    %820 = vmatprep.subr.bf16.mxu0 0
    %821 = vmatpush1.bf16.msra.mxu0 0
    %822 = vmatprep.subr.bf16.mxu0 0
    %823 = vmatpush1.bf16.msra.mxu0 0
    %824 = vmatprep.subr.bf16.mxu0 0
    %825 = vmatpush1.bf16.msra.mxu0 0
    %826 = vmatprep.subr.bf16.mxu0 0
    %827 = vmatpush1.bf16.msra.mxu0 0
    %828 = vmatprep.subr.bf16.mxu0 0
    %829 = vmatpush1.bf16.msra.mxu0 0
    %830 = vmatprep.subr.bf16.mxu0 0
    %831 = vmatpush1.bf16.msra.mxu0 0
    %832 = vmatprep.subr.bf16.mxu0 0
    %833 = vmatpush1.bf16.msra.mxu0 0
    %834 = vmatprep.subr.bf16.mxu0 0
    %835 = vmatpush1.bf16.msra.mxu0 0
    %836 = vmatprep.mubr.bf16.mxu0 0
    %837 = vmatmul.mubr.bf16.gmra.mrb[0].mxu0 %v708
    %v838 = vpop.f32.mrb[0].mxu0
    %v839 = vadd.f32 0.0, %v838
    %v840 = vpop.f32.mrb[0].mxu0
    %v841 = vadd.f32 0.0, %v840
    %v842 = vpop.f32.mrb[0].mxu0
    %v843 = vpop.f32.mrb[0].mxu0
    %844 = vdwg.mxu0
    %845 = vmatprep.subr.bf16.mxu0 %v591
    %846 = vmatpush1.bf16.msra.mxu0 %v590
    %847 = vmatprep.subr.bf16.mxu0 %v595
    %848 = vmatpush1.bf16.msra.mxu0 %v594
    %849 = vmatprep.subr.bf16.mxu0 %v599
    %850 = vmatpush1.bf16.msra.mxu0 %v598
    %851 = vmatprep.subr.bf16.mxu0 %v603
    %852 = vmatpush1.bf16.msra.mxu0 %v602
    %853 = vmatprep.subr.bf16.mxu0 %v802
    %854 = vmatpush1.bf16.msra.mxu0 %v799
    %855 = vmatprep.subr.bf16.mxu0 0
    %856 = vmatpush1.bf16.msra.mxu0 0
    %857 = vmatprep.subr.bf16.mxu0 0
    %858 = vmatpush1.bf16.msra.mxu0 0
    %859 = vmatprep.subr.bf16.mxu0 0
    %860 = vmatpush1.bf16.msra.mxu0 0
    %861 = vmatprep.subr.bf16.mxu0 0
    %862 = vmatpush1.bf16.msra.mxu0 0
    %863 = vmatprep.subr.bf16.mxu0 0
    %864 = vmatpush1.bf16.msra.mxu0 0
    %865 = vmatprep.subr.bf16.mxu0 0
    %866 = vmatpush1.bf16.msra.mxu0 0
    %867 = vmatprep.subr.bf16.mxu0 0
    %868 = vmatpush1.bf16.msra.mxu0 0
    %869 = vmatprep.subr.bf16.mxu0 0
    %870 = vmatpush1.bf16.msra.mxu0 0
    %871 = vmatprep.subr.bf16.mxu0 0
    %872 = vmatpush1.bf16.msra.mxu0 0
    %873 = vmatprep.subr.bf16.mxu0 0
    %874 = vmatpush1.bf16.msra.mxu0 0
    %875 = vmatprep.subr.bf16.mxu0 0
    %876 = vmatpush1.bf16.msra.mxu0 0
    %877 = vmatprep.mubr.bf16.mxu0 0
    %878 = vmatmul.mubr.bf16.gmra.mrb[0].mxu0 %v708
    %v879 = vpop.f32.mrb[0].mxu0
    %v880 = vadd.f32 0.0, %v879
    %v881 = vpop.f32.mrb[0].mxu0
    %v882 = vadd.f32 0.0, %v881
    %v883 = vpop.f32.mrb[0].mxu0
    %v884 = vpop.f32.mrb[0].mxu0
    %885 = vdwg.mxu0
    %v886 = vadd.f32 %v745, %v839
    %v887 = vadd.f32 %v747, %v841
    %v888 = vadd.f32 %v786, %v880
    %v889 = vadd.f32 %v788, %v882
    %v890 = vld [vmem:[%s3] sm:$0xff]
    %892 = vset.pattern.permute.xlu0 0
    %893 = vperm.xlu0 %892, %v890
    %v894 = vpop.permute.xlu0 %893
    %v896 = vadd.f32 %v886, %v894
    %v897 = vadd.f32 %v887, %v894
    %v898 = vadd.f32 %v888, %v894
    %v899 = vadd.f32 %v889, %v894
    %v900 = vmax.f32 %v896, 0.0
    %v901 = vmax.f32 %v897, 0.0
    %v902 = vmax.f32 %v898, 0.0
    %v903 = vmax.f32 %v899, 0.0
    %904 = vst.msk [vmem:[#allocation3] sm:$0xff] %vm54, 0.0
    %vm905 = vcmask 277640
    %906 = vst.msk [vmem:[#allocation3 + $0x10] sm:$0xff] %vm905, 0.0
    %909 = vrot.lane.b32.xlu0 %v900, 17
    %v910 = vpop.permute.xlu0 %909
    %911 = vrot.lane.b32.xlu0 %v901, 17
    %v912 = vpop.permute.xlu0 %911
    %v913 = vsel %vm54, %v910, %v912
    %vm917 = vcmask 1047688
    %918 = vst.msk [vmem:[#allocation3] sm:$0xff] %vm917, %v910
    %919 = vst [vmem:[#allocation3 + $0x8] sm:$0xff] %v913
    %920 = vst.msk [vmem:[#allocation3 + $0x10] sm:$0xff] %vm54, %v912
    %vm921 = vcmask 417040
    %922 = vst.msk [vmem:[#allocation3 + $0x10] sm:$0xff] %vm921, 0.0
    %vm923 = vcmask 556440
    %924 = vst.msk [vmem:[#allocation3 + $0x20] sm:$0xff] %vm923, 0.0
    %927 = vrot.lane.b32.xlu0 %v902, 51
    %v928 = vpop.permute.xlu0 %927
    %929 = vrot.lane.b32.xlu0 %v903, 51
    %v930 = vpop.permute.xlu0 %929
    %v931 = vsel %vm73, %v928, %v930
    %vm935 = vcmask 1047960
    %936 = vst.msk [vmem:[#allocation3 + $0x10] sm:$0xff] %vm935, %v928
    %937 = vst [vmem:[#allocation3 + $0x18] sm:$0xff] %v931
    %938 = vst.msk [vmem:[#allocation3 + $0x20] sm:$0xff] %vm73, %v930
    %v939 = vld [vmem:[#allocation3] sm:$0xff]
    %v940 = vld [vmem:[#allocation3 + $0x8] sm:$0xff]
    %v941 = vsel %vm94, %v939, 0.0
    %v942 = vsel %vm95, %v940, 0.0
    %943 = vst [vmem:[#allocation5] sm:$0xff] %v941
    %944 = vst [vmem:[#allocation5 + $0x8] sm:$0xff] %v942
    %v945 = vld [vmem:[#allocation3 + $0x10] sm:$0xff]
    %v946 = vld [vmem:[#allocation3 + $0x18] sm:$0xff]
    %v947 = vld [vmem:[#allocation3 + $0x20] sm:$0xff]
    %951 = vrot.lane.b32.xlu0 %v945, 94
    %v952 = vpop.permute.xlu0 %951
    %953 = vrot.lane.b32.xlu0 %v946, 94
    %v954 = vpop.permute.xlu0 %953
    %955 = vrot.lane.b32.xlu0 %v947, 94
    %v956 = vpop.permute.xlu0 %955
    %v957 = vsel %vm112, %v952, %v954
    %v958 = vsel %vm112, %v954, %v956
    %v961 = vsel %vm94, %v957, 0.0
    %v962 = vsel %vm95, %v958, 0.0
    %963 = vst [vmem:[#allocation5 + $0x10] sm:$0xff] %v961
    %964 = vst [vmem:[#allocation5 + $0x18] sm:$0xff] %v962
    %v965 = vld [vmem:[#allocation3] sm:$0xff]
    %v966 = vld [vmem:[#allocation3 + $0x8] sm:$0xff]
    %v967 = vld [vmem:[#allocation3 + $0x10] sm:$0xff]
    %971 = vrot.lane.b32.xlu0 %v965, 127
    %v972 = vpop.permute.xlu0 %971
    %973 = vrot.lane.b32.xlu0 %v966, 127
    %v974 = vpop.permute.xlu0 %973
    %975 = vrot.lane.b32.xlu0 %v967, 127
    %v976 = vpop.permute.xlu0 %975
    %v977 = vsel %vm133, %v972, %v974
    %v978 = vsel %vm133, %v974, %v976
    %981 = vst [vmem:[#allocation5 + $0x20] sm:$0xff] %v977
    %982 = vst [vmem:[#allocation5 + $0x28] sm:$0xff] %v978
    %v983 = vld [vmem:[#allocation3 + $0x10] sm:$0xff]
    %v984 = vld [vmem:[#allocation3 + $0x18] sm:$0xff]
    %v985 = vld [vmem:[#allocation3 + $0x20] sm:$0xff]
    %989 = vrot.lane.b32.xlu0 %v983, 93
    %v990 = vpop.permute.xlu0 %989
    %991 = vrot.lane.b32.xlu0 %v984, 93
    %v992 = vpop.permute.xlu0 %991
    %993 = vrot.lane.b32.xlu0 %v985, 93
    %v994 = vpop.permute.xlu0 %993
    %v995 = vsel %vm152, %v990, %v992
    %v996 = vsel %vm152, %v992, %v994
    %999 = vst [vmem:[#allocation5 + $0x30] sm:$0xff] %v995
    %1000 = vst [vmem:[#allocation5 + $0x38] sm:$0xff] %v996
    %v1001 = vld [vmem:[#allocation3] sm:$0xff]
    %v1002 = vld [vmem:[#allocation3 + $0x8] sm:$0xff]
    %v1003 = vld [vmem:[#allocation3 + $0x10] sm:$0xff]
    %1007 = vrot.lane.b32.xlu0 %v1001, 126
    %v1008 = vpop.permute.xlu0 %1007
    %1009 = vrot.lane.b32.xlu0 %v1002, 126
    %v1010 = vpop.permute.xlu0 %1009
    %1011 = vrot.lane.b32.xlu0 %v1003, 126
    %v1012 = vpop.permute.xlu0 %1011
    %v1013 = vsel %vm182, %v1008, %v1010
    %v1014 = vsel %vm182, %v1010, %v1012
    %v1017 = vsel %vm171, %v1013, 0.0
    %v1018 = vsel %vm172, %v1014, 0.0
    %1019 = vst [vmem:[#allocation5 + $0x40] sm:$0xff] %v1017
    %1020 = vst [vmem:[#allocation5 + $0x48] sm:$0xff] %v1018
    %v1021 = vld [vmem:[#allocation3 + $0x10] sm:$0xff]
    %v1022 = vld [vmem:[#allocation3 + $0x18] sm:$0xff]
    %v1023 = vld [vmem:[#allocation3 + $0x20] sm:$0xff]
    %1027 = vrot.lane.b32.xlu0 %v1021, 92
    %v1028 = vpop.permute.xlu0 %1027
    %1029 = vrot.lane.b32.xlu0 %v1022, 92
    %v1030 = vpop.permute.xlu0 %1029
    %1031 = vrot.lane.b32.xlu0 %v1023, 92
    %v1032 = vpop.permute.xlu0 %1031
    %v1033 = vsel %vm203, %v1028, %v1030
    %v1034 = vsel %vm203, %v1030, %v1032
    %v1037 = vsel %vm171, %v1033, 0.0
    %v1038 = vsel %vm172, %v1034, 0.0
    %1039 = vst [vmem:[#allocation5 + $0x50] sm:$0xff] %v1037
    %1040 = vst [vmem:[#allocation5 + $0x58] sm:$0xff] %v1038
    %v1041 = vld [vmem:[#allocation3] sm:$0xff]
    %v1042 = vld [vmem:[#allocation3 + $0x8] sm:$0xff]
    %v1043 = vld [vmem:[#allocation3 + $0x10] sm:$0xff]
    %1047 = vrot.lane.b32.xlu0 %v1041, 112
    %v1048 = vpop.permute.xlu0 %1047
    %1049 = vrot.lane.b32.xlu0 %v1042, 112
    %v1050 = vpop.permute.xlu0 %1049
    %1051 = vrot.lane.b32.xlu0 %v1043, 112
    %v1052 = vpop.permute.xlu0 %1051
    %v1053 = vsel %vm224, %v1048, %v1050
    %v1054 = vsel %vm224, %v1050, %v1052
    %v1057 = vsel %vm94, %v1053, 0.0
    %v1058 = vsel %vm95, %v1054, 0.0
    %1059 = vst [vmem:[#allocation5 + $0x60] sm:$0xff] %v1057
    %1060 = vst [vmem:[#allocation5 + $0x68] sm:$0xff] %v1058
    %v1061 = vld [vmem:[#allocation3 + $0x10] sm:$0xff]
    %v1062 = vld [vmem:[#allocation3 + $0x18] sm:$0xff]
    %v1063 = vld [vmem:[#allocation3 + $0x20] sm:$0xff]
    %1067 = vrot.lane.b32.xlu0 %v1061, 78
    %v1068 = vpop.permute.xlu0 %1067
    %1069 = vrot.lane.b32.xlu0 %v1062, 78
    %v1070 = vpop.permute.xlu0 %1069
    %1071 = vrot.lane.b32.xlu0 %v1063, 78
    %v1072 = vpop.permute.xlu0 %1071
    %v1073 = vsel %vm245, %v1068, %v1070
    %v1074 = vsel %vm245, %v1070, %v1072
    %v1077 = vsel %vm94, %v1073, 0.0
    %v1078 = vsel %vm95, %v1074, 0.0
    %1079 = vst [vmem:[#allocation5 + $0x70] sm:$0xff] %v1077
    %1080 = vst [vmem:[#allocation5 + $0x78] sm:$0xff] %v1078
    %v1081 = vld [vmem:[#allocation3] sm:$0xff]
    %v1082 = vld [vmem:[#allocation3 + $0x8] sm:$0xff]
    %v1083 = vld [vmem:[#allocation3 + $0x10] sm:$0xff]
    %1087 = vrot.lane.b32.xlu0 %v1081, 111
    %v1088 = vpop.permute.xlu0 %1087
    %1089 = vrot.lane.b32.xlu0 %v1082, 111
    %v1090 = vpop.permute.xlu0 %1089
    %1091 = vrot.lane.b32.xlu0 %v1083, 111
    %v1092 = vpop.permute.xlu0 %1091
    %v1093 = vsel %vm266, %v1088, %v1090
    %v1094 = vsel %vm266, %v1090, %v1092
    %1097 = vst [vmem:[#allocation5 + $0x80] sm:$0xff] %v1093
    %1098 = vst [vmem:[#allocation5 + $0x88] sm:$0xff] %v1094
    %v1099 = vld [vmem:[#allocation3 + $0x10] sm:$0xff]
    %v1100 = vld [vmem:[#allocation3 + $0x18] sm:$0xff]
    %v1101 = vld [vmem:[#allocation3 + $0x20] sm:$0xff]
    %1105 = vrot.lane.b32.xlu0 %v1099, 77
    %v1106 = vpop.permute.xlu0 %1105
    %1107 = vrot.lane.b32.xlu0 %v1100, 77
    %v1108 = vpop.permute.xlu0 %1107
    %1109 = vrot.lane.b32.xlu0 %v1101, 77
    %v1110 = vpop.permute.xlu0 %1109
    %v1111 = vsel %vm285, %v1106, %v1108
    %v1112 = vsel %vm285, %v1108, %v1110
    %1115 = vst [vmem:[#allocation5 + $0x90] sm:$0xff] %v1111
    %1116 = vst [vmem:[#allocation5 + $0x98] sm:$0xff] %v1112
    %v1117 = vld [vmem:[#allocation3] sm:$0xff]
    %v1118 = vld [vmem:[#allocation3 + $0x8] sm:$0xff]
    %v1119 = vld [vmem:[#allocation3 + $0x10] sm:$0xff]
    %1123 = vrot.lane.b32.xlu0 %v1117, 110
    %v1124 = vpop.permute.xlu0 %1123
    %1125 = vrot.lane.b32.xlu0 %v1118, 110
    %v1126 = vpop.permute.xlu0 %1125
    %1127 = vrot.lane.b32.xlu0 %v1119, 110
    %v1128 = vpop.permute.xlu0 %1127
    %v1129 = vsel %vm304, %v1124, %v1126
    %v1130 = vsel %vm304, %v1126, %v1128
    %v1133 = vsel %vm171, %v1129, 0.0
    %v1134 = vsel %vm172, %v1130, 0.0
    %1135 = vst [vmem:[#allocation5 + $0xa0] sm:$0xff] %v1133
    %1136 = vst [vmem:[#allocation5 + $0xa8] sm:$0xff] %v1134
    %v1137 = vld [vmem:[#allocation3 + $0x10] sm:$0xff]
    %v1138 = vld [vmem:[#allocation3 + $0x18] sm:$0xff]
    %v1139 = vld [vmem:[#allocation3 + $0x20] sm:$0xff]
    %1143 = vrot.lane.b32.xlu0 %v1137, 76
    %v1144 = vpop.permute.xlu0 %1143
    %1145 = vrot.lane.b32.xlu0 %v1138, 76
    %v1146 = vpop.permute.xlu0 %1145
    %1147 = vrot.lane.b32.xlu0 %v1139, 76
    %v1148 = vpop.permute.xlu0 %1147
    %v1149 = vsel %vm325, %v1144, %v1146
    %v1150 = vsel %vm325, %v1146, %v1148
    %v1153 = vsel %vm171, %v1149, 0.0
    %v1154 = vsel %vm172, %v1150, 0.0
    %1155 = vst [vmem:[#allocation5 + $0xb0] sm:$0xff] %v1153
    %1156 = vst [vmem:[#allocation5 + $0xb8] sm:$0xff] %v1154
    %v1157 = vld [vmem:[#allocation3] sm:$0xff]
    %v1158 = vld [vmem:[#allocation3 + $0x8] sm:$0xff]
    %v1159 = vld [vmem:[#allocation3 + $0x10] sm:$0xff]
    %1163 = vrot.lane.b32.xlu0 %v1157, 96
    %v1164 = vpop.permute.xlu0 %1163
    %1165 = vrot.lane.b32.xlu0 %v1158, 96
    %v1166 = vpop.permute.xlu0 %1165
    %1167 = vrot.lane.b32.xlu0 %v1159, 96
    %v1168 = vpop.permute.xlu0 %1167
    %v1169 = vsel %vm346, %v1164, %v1166
    %v1170 = vsel %vm346, %v1166, %v1168
    %v1173 = vsel %vm94, %v1169, 0.0
    %v1174 = vsel %vm95, %v1170, 0.0
    %1175 = vst [vmem:[#allocation5 + $0xc0] sm:$0xff] %v1173
    %1176 = vst [vmem:[#allocation5 + $0xc8] sm:$0xff] %v1174
    %v1177 = vld [vmem:[#allocation3 + $0x10] sm:$0xff]
    %v1178 = vld [vmem:[#allocation3 + $0x18] sm:$0xff]
    %v1179 = vld [vmem:[#allocation3 + $0x20] sm:$0xff]
    %1183 = vrot.lane.b32.xlu0 %v1177, 62
    %v1184 = vpop.permute.xlu0 %1183
    %1185 = vrot.lane.b32.xlu0 %v1178, 62
    %v1186 = vpop.permute.xlu0 %1185
    %1187 = vrot.lane.b32.xlu0 %v1179, 62
    %v1188 = vpop.permute.xlu0 %1187
    %v1189 = vsel %vm367, %v1184, %v1186
    %v1190 = vsel %vm367, %v1186, %v1188
    %v1193 = vsel %vm94, %v1189, 0.0
    %v1194 = vsel %vm95, %v1190, 0.0
    %1195 = vst [vmem:[#allocation5 + $0xd0] sm:$0xff] %v1193
    %1196 = vst [vmem:[#allocation5 + $0xd8] sm:$0xff] %v1194
    %v1197 = vld [vmem:[#allocation3] sm:$0xff]
    %v1198 = vld [vmem:[#allocation3 + $0x8] sm:$0xff]
    %v1199 = vld [vmem:[#allocation3 + $0x10] sm:$0xff]
    %1203 = vrot.lane.b32.xlu0 %v1197, 95
    %v1204 = vpop.permute.xlu0 %1203
    %1205 = vrot.lane.b32.xlu0 %v1198, 95
    %v1206 = vpop.permute.xlu0 %1205
    %1207 = vrot.lane.b32.xlu0 %v1199, 95
    %v1208 = vpop.permute.xlu0 %1207
    %v1209 = vsel %vm388, %v1204, %v1206
    %v1210 = vsel %vm388, %v1206, %v1208
    %1213 = vst [vmem:[#allocation5 + $0xe0] sm:$0xff] %v1209
    %1214 = vst [vmem:[#allocation5 + $0xe8] sm:$0xff] %v1210
    %v1215 = vld [vmem:[#allocation3 + $0x10] sm:$0xff]
    %v1216 = vld [vmem:[#allocation3 + $0x18] sm:$0xff]
    %v1217 = vld [vmem:[#allocation3 + $0x20] sm:$0xff]
    %1221 = vrot.lane.b32.xlu0 %v1215, 61
    %v1222 = vpop.permute.xlu0 %1221
    %1223 = vrot.lane.b32.xlu0 %v1216, 61
    %v1224 = vpop.permute.xlu0 %1223
    %1225 = vrot.lane.b32.xlu0 %v1217, 61
    %v1226 = vpop.permute.xlu0 %1225
    %v1227 = vsel %vm407, %v1222, %v1224
    %v1228 = vsel %vm407, %v1224, %v1226
    %1231 = vst [vmem:[#allocation5 + $0xf0] sm:$0xff] %v1227
    %1232 = vst [vmem:[#allocation5 + $0xf8] sm:$0xff] %v1228
    %v1233 = vld [vmem:[#allocation3] sm:$0xff]
    %v1234 = vld [vmem:[#allocation3 + $0x8] sm:$0xff]
    %v1235 = vld [vmem:[#allocation3 + $0x10] sm:$0xff]
    %1239 = vrot.lane.b32.xlu0 %v1233, 94
    %v1240 = vpop.permute.xlu0 %1239
    %1241 = vrot.lane.b32.xlu0 %v1234, 94
    %v1242 = vpop.permute.xlu0 %1241
    %1243 = vrot.lane.b32.xlu0 %v1235, 94
    %v1244 = vpop.permute.xlu0 %1243
    %v1245 = vsel %vm112, %v1240, %v1242
    %v1246 = vsel %vm112, %v1242, %v1244
    %v1249 = vsel %vm171, %v1245, 0.0
    %v1250 = vsel %vm172, %v1246, 0.0
    %1251 = vst [vmem:[#allocation5 + $0x100] sm:$0xff] %v1249
    %1252 = vst [vmem:[#allocation5 + $0x108] sm:$0xff] %v1250
    %v1253 = vld [vmem:[#allocation3 + $0x10] sm:$0xff]
    %v1254 = vld [vmem:[#allocation3 + $0x18] sm:$0xff]
    %v1255 = vld [vmem:[#allocation3 + $0x20] sm:$0xff]
    %1259 = vrot.lane.b32.xlu0 %v1253, 60
    %v1260 = vpop.permute.xlu0 %1259
    %1261 = vrot.lane.b32.xlu0 %v1254, 60
    %v1262 = vpop.permute.xlu0 %1261
    %1263 = vrot.lane.b32.xlu0 %v1255, 60
    %v1264 = vpop.permute.xlu0 %1263
    %v1265 = vsel %vm446, %v1260, %v1262
    %v1266 = vsel %vm446, %v1262, %v1264
    %v1269 = vsel %vm171, %v1265, 0.0
    %v1270 = vsel %vm172, %v1266, 0.0
    %1271 = vst [vmem:[#allocation5 + $0x110] sm:$0xff] %v1269
    %1272 = vst [vmem:[#allocation5 + $0x118] sm:$0xff] %v1270
    %v1273 = vld [vmem:[%s4] sm:$0xf]
    %v1274 = vld [vmem:[#allocation5] sm:$0xff]
    %v1275 = vld [vmem:[#allocation5 + $0x8] sm:$0xff]
    %v1276 = vld [vmem:[#allocation5 + $0x10] sm:$0xff]
    %v1277 = vld [vmem:[#allocation5 + $0x18] sm:$0xff]
    %v1278 = vld [vmem:[#allocation5 + $0x20] sm:$0xff]
    %v1279 = vld [vmem:[#allocation5 + $0x28] sm:$0xff]
    %v1280 = vld [vmem:[#allocation5 + $0x30] sm:$0xff]
    %v1281 = vld [vmem:[#allocation5 + $0x38] sm:$0xff]
    %v1282 = vld [vmem:[#allocation5 + $0x40] sm:$0xff]
    %v1283 = vld [vmem:[#allocation5 + $0x48] sm:$0xff]
    %v1284 = vld [vmem:[#allocation5 + $0x50] sm:$0xff]
    %v1285 = vld [vmem:[#allocation5 + $0x58] sm:$0xff]
    %v1286 = vld [vmem:[#allocation5 + $0x60] sm:$0xff]
    %v1287 = vld [vmem:[#allocation5 + $0x68] sm:$0xff]
    %v1288 = vld [vmem:[#allocation5 + $0x70] sm:$0xff]
    %v1289 = vld [vmem:[#allocation5 + $0x78] sm:$0xff]
    %v1290 = vld [vmem:[#allocation5 + $0x80] sm:$0xff]
    %v1291 = vld [vmem:[#allocation5 + $0x88] sm:$0xff]
    %v1292 = vld [vmem:[#allocation5 + $0x90] sm:$0xff]
    %v1293 = vld [vmem:[#allocation5 + $0x98] sm:$0xff]
    %v1294 = vld [vmem:[#allocation5 + $0xa0] sm:$0xff]
    %v1295 = vld [vmem:[#allocation5 + $0xa8] sm:$0xff]
    %v1296 = vld [vmem:[#allocation5 + $0xb0] sm:$0xff]
    %v1297 = vld [vmem:[#allocation5 + $0xb8] sm:$0xff]
    %v1298 = vld [vmem:[#allocation5 + $0xc0] sm:$0xff]
    %v1299 = vld [vmem:[#allocation5 + $0xc8] sm:$0xff]
    %v1300 = vld [vmem:[#allocation5 + $0xd0] sm:$0xff]
    %v1301 = vld [vmem:[#allocation5 + $0xd8] sm:$0xff]
    %v1302 = vld [vmem:[#allocation5 + $0xe0] sm:$0xff]
    %v1303 = vld [vmem:[#allocation5 + $0xe8] sm:$0xff]
    %v1304 = vld [vmem:[#allocation5 + $0xf0] sm:$0xff]
    %v1305 = vld [vmem:[#allocation5 + $0xf8] sm:$0xff]
    %v1306 = vld [vmem:[#allocation5 + $0x100] sm:$0xff]
    %v1307 = vld [vmem:[#allocation5 + $0x108] sm:$0xff]
    %v1308 = vld [vmem:[#allocation5 + $0x110] sm:$0xff]
    %v1309 = vld [vmem:[#allocation5 + $0x118] sm:$0xff]
    %v1310 = vpack.c.bf16 %v1273, %v1273
    %v1311 = vunpack.c.l.bf16 %v1310
    %v1312 = vsub.f32 %v1273, %v1311
    %v1313 = vpack.c.bf16 %v1312, %v1312
    %v1314 = vpack.c.bf16 %v1278, %v1274
    %v1315 = vpack.c.bf16 %v1279, %v1275
    %v1316 = vpack.c.bf16 %v1280, %v1276
    %v1317 = vpack.c.bf16 %v1281, %v1277
    %v1318 = vpack.c.bf16 %v1286, %v1282
    %v1319 = vpack.c.bf16 %v1287, %v1283
    %v1320 = vpack.c.bf16 %v1288, %v1284
    %v1321 = vpack.c.bf16 %v1289, %v1285
    %v1322 = vpack.c.bf16 %v1294, %v1290
    %v1323 = vpack.c.bf16 %v1295, %v1291
    %v1324 = vpack.c.bf16 %v1296, %v1292
    %v1325 = vpack.c.bf16 %v1297, %v1293
    %v1326 = vpack.c.bf16 %v1302, %v1298
    %v1327 = vpack.c.bf16 %v1303, %v1299
    %v1328 = vpack.c.bf16 %v1304, %v1300
    %v1329 = vpack.c.bf16 %v1305, %v1301
    %v1330 = vpack.c.bf16 %v1306, %v1306
    %v1331 = vpack.c.bf16 %v1307, %v1307
    %v1332 = vpack.c.bf16 %v1308, %v1308
    %v1333 = vpack.c.bf16 %v1309, %v1309
    %v1334 = vunpack.c.l.bf16 %v1314
    %v1335 = vunpack.c.l.bf16 %v1315
    %v1336 = vunpack.c.l.bf16 %v1316
    %v1337 = vunpack.c.l.bf16 %v1317
    %v1338 = vunpack.c.h.bf16 %v1314
    %v1339 = vunpack.c.h.bf16 %v1315
    %v1340 = vunpack.c.h.bf16 %v1316
    %v1341 = vunpack.c.h.bf16 %v1317
    %v1342 = vunpack.c.l.bf16 %v1318
    %v1343 = vunpack.c.l.bf16 %v1319
    %v1344 = vunpack.c.l.bf16 %v1320
    %v1345 = vunpack.c.l.bf16 %v1321
    %v1346 = vunpack.c.h.bf16 %v1318
    %v1347 = vunpack.c.h.bf16 %v1319
    %v1348 = vunpack.c.h.bf16 %v1320
    %v1349 = vunpack.c.h.bf16 %v1321
    %v1350 = vunpack.c.l.bf16 %v1322
    %v1351 = vunpack.c.l.bf16 %v1323
    %v1352 = vunpack.c.l.bf16 %v1324
    %v1353 = vunpack.c.l.bf16 %v1325
    %v1354 = vunpack.c.h.bf16 %v1322
    %v1355 = vunpack.c.h.bf16 %v1323
    %v1356 = vunpack.c.h.bf16 %v1324
    %v1357 = vunpack.c.h.bf16 %v1325
    %v1358 = vunpack.c.l.bf16 %v1326
    %v1359 = vunpack.c.l.bf16 %v1327
    %v1360 = vunpack.c.l.bf16 %v1328
    %v1361 = vunpack.c.l.bf16 %v1329
    %v1362 = vunpack.c.h.bf16 %v1326
    %v1363 = vunpack.c.h.bf16 %v1327
    %v1364 = vunpack.c.h.bf16 %v1328
    %v1365 = vunpack.c.h.bf16 %v1329
    %v1366 = vunpack.c.l.bf16 %v1330
    %v1367 = vunpack.c.l.bf16 %v1331
    %v1368 = vunpack.c.l.bf16 %v1332
    %v1369 = vunpack.c.l.bf16 %v1333
    %v1370 = vsub.f32 %v1274, %v1334
    %v1371 = vsub.f32 %v1275, %v1335
    %v1372 = vsub.f32 %v1276, %v1336
    %v1373 = vsub.f32 %v1277, %v1337
    %v1374 = vsub.f32 %v1278, %v1338
    %v1375 = vsub.f32 %v1279, %v1339
    %v1376 = vsub.f32 %v1280, %v1340
    %v1377 = vsub.f32 %v1281, %v1341
    %v1378 = vsub.f32 %v1282, %v1342
    %v1379 = vsub.f32 %v1283, %v1343
    %v1380 = vsub.f32 %v1284, %v1344
    %v1381 = vsub.f32 %v1285, %v1345
    %v1382 = vsub.f32 %v1286, %v1346
    %v1383 = vsub.f32 %v1287, %v1347
    %v1384 = vsub.f32 %v1288, %v1348
    %v1385 = vsub.f32 %v1289, %v1349
    %v1386 = vsub.f32 %v1290, %v1350
    %v1387 = vsub.f32 %v1291, %v1351
    %v1388 = vsub.f32 %v1292, %v1352
    %v1389 = vsub.f32 %v1293, %v1353
    %v1390 = vsub.f32 %v1294, %v1354
    %v1391 = vsub.f32 %v1295, %v1355
    %v1392 = vsub.f32 %v1296, %v1356
    %v1393 = vsub.f32 %v1297, %v1357
    %v1394 = vsub.f32 %v1298, %v1358
    %v1395 = vsub.f32 %v1299, %v1359
    %v1396 = vsub.f32 %v1300, %v1360
    %v1397 = vsub.f32 %v1301, %v1361
    %v1398 = vsub.f32 %v1302, %v1362
    %v1399 = vsub.f32 %v1303, %v1363
    %v1400 = vsub.f32 %v1304, %v1364
    %v1401 = vsub.f32 %v1305, %v1365
    %v1402 = vsub.f32 %v1306, %v1366
    %v1403 = vsub.f32 %v1307, %v1367
    %v1404 = vsub.f32 %v1308, %v1368
    %v1405 = vsub.f32 %v1309, %v1369
    %v1406 = vpack.c.bf16 %v1374, %v1370
    %v1407 = vpack.c.bf16 %v1375, %v1371
    %v1408 = vpack.c.bf16 %v1376, %v1372
    %v1409 = vpack.c.bf16 %v1377, %v1373
    %v1410 = vpack.c.bf16 %v1382, %v1378
    %v1411 = vpack.c.bf16 %v1383, %v1379
    %v1412 = vpack.c.bf16 %v1384, %v1380
    %v1413 = vpack.c.bf16 %v1385, %v1381
    %v1414 = vpack.c.bf16 %v1390, %v1386
    %v1415 = vpack.c.bf16 %v1391, %v1387
    %v1416 = vpack.c.bf16 %v1392, %v1388
    %v1417 = vpack.c.bf16 %v1393, %v1389
    %v1418 = vpack.c.bf16 %v1398, %v1394
    %v1419 = vpack.c.bf16 %v1399, %v1395
    %v1420 = vpack.c.bf16 %v1400, %v1396
    %v1421 = vpack.c.bf16 %v1401, %v1397
    %v1422 = vpack.c.bf16 %v1402, %v1402
    %v1423 = vpack.c.bf16 %v1403, %v1403
    %v1424 = vpack.c.bf16 %v1404, %v1404
    %v1425 = vpack.c.bf16 %v1405, %v1405
    %v1427 = vsel %vm608, %v1313, 0
    %v1430 = vsel %vm612, %v1330, 0
    %v1433 = vsel %vm612, %v1331, 0
    %v1436 = vsel %vm612, %v1332, 0
    %v1439 = vsel %vm612, %v1333, 0
    %1441 = vmatprep.subr.bf16.mxu0 %v1315
    %1442 = vmatpush1.bf16.msra.mxu0 %v1314
    %1443 = vmatprep.subr.bf16.mxu0 %v1319
    %1444 = vmatpush1.bf16.msra.mxu0 %v1318
    %1445 = vmatprep.subr.bf16.mxu0 %v1323
    %1446 = vmatpush1.bf16.msra.mxu0 %v1322
    %1447 = vmatprep.subr.bf16.mxu0 %v1327
    %1448 = vmatpush1.bf16.msra.mxu0 %v1326
    %1449 = vmatprep.subr.bf16.mxu0 %v1433
    %1450 = vmatpush1.bf16.msra.mxu0 %v1430
    %1451 = vmatprep.subr.bf16.mxu0 0
    %1452 = vmatpush1.bf16.msra.mxu0 0
    %1453 = vmatprep.subr.bf16.mxu0 0
    %1454 = vmatpush1.bf16.msra.mxu0 0
    %1455 = vmatprep.subr.bf16.mxu0 0
    %1456 = vmatpush1.bf16.msra.mxu0 0
    %1457 = vmatprep.subr.bf16.mxu0 0
    %1458 = vmatpush1.bf16.msra.mxu0 0
    %1459 = vmatprep.subr.bf16.mxu0 0
    %1460 = vmatpush1.bf16.msra.mxu0 0
    %1461 = vmatprep.subr.bf16.mxu0 0
    %1462 = vmatpush1.bf16.msra.mxu0 0
    %1463 = vmatprep.subr.bf16.mxu0 0
    %1464 = vmatpush1.bf16.msra.mxu0 0
    %1465 = vmatprep.subr.bf16.mxu0 0
    %1466 = vmatpush1.bf16.msra.mxu0 0
    %1467 = vmatprep.subr.bf16.mxu0 0
    %1468 = vmatpush1.bf16.msra.mxu0 0
    %1469 = vmatprep.subr.bf16.mxu0 0
    %1470 = vmatpush1.bf16.msra.mxu0 0
    %1471 = vmatprep.subr.bf16.mxu0 0
    %1472 = vmatpush1.bf16.msra.mxu0 0
    %1473 = vmatprep.mubr.bf16.mxu0 0
    %1474 = vmatmul.mubr.bf16.gmra.mrb[0].mxu0 %v1427
    %v1475 = vpop.f32.mrb[0].mxu0
    %v1476 = vadd.f32 0.0, %v1475
    %v1477 = vpop.f32.mrb[0].mxu0
    %v1478 = vadd.f32 0.0, %v1477
    %v1479 = vpop.f32.mrb[0].mxu0
    %v1480 = vpop.f32.mrb[0].mxu0
    %1481 = vdwg.mxu0
    %1482 = vmatprep.subr.bf16.mxu0 %v1317
    %1483 = vmatpush1.bf16.msra.mxu0 %v1316
    %1484 = vmatprep.subr.bf16.mxu0 %v1321
    %1485 = vmatpush1.bf16.msra.mxu0 %v1320
    %1486 = vmatprep.subr.bf16.mxu0 %v1325
    %1487 = vmatpush1.bf16.msra.mxu0 %v1324
    %1488 = vmatprep.subr.bf16.mxu0 %v1329
    %1489 = vmatpush1.bf16.msra.mxu0 %v1328
    %1490 = vmatprep.subr.bf16.mxu0 %v1439
    %1491 = vmatpush1.bf16.msra.mxu0 %v1436
    %1492 = vmatprep.subr.bf16.mxu0 0
    %1493 = vmatpush1.bf16.msra.mxu0 0
    %1494 = vmatprep.subr.bf16.mxu0 0
    %1495 = vmatpush1.bf16.msra.mxu0 0
    %1496 = vmatprep.subr.bf16.mxu0 0
    %1497 = vmatpush1.bf16.msra.mxu0 0
    %1498 = vmatprep.subr.bf16.mxu0 0
    %1499 = vmatpush1.bf16.msra.mxu0 0
    %1500 = vmatprep.subr.bf16.mxu0 0
    %1501 = vmatpush1.bf16.msra.mxu0 0
    %1502 = vmatprep.subr.bf16.mxu0 0
    %1503 = vmatpush1.bf16.msra.mxu0 0
    %1504 = vmatprep.subr.bf16.mxu0 0
    %1505 = vmatpush1.bf16.msra.mxu0 0
    %1506 = vmatprep.subr.bf16.mxu0 0
    %1507 = vmatpush1.bf16.msra.mxu0 0
    %1508 = vmatprep.subr.bf16.mxu0 0
    %1509 = vmatpush1.bf16.msra.mxu0 0
    %1510 = vmatprep.subr.bf16.mxu0 0
    %1511 = vmatpush1.bf16.msra.mxu0 0
    %1512 = vmatprep.subr.bf16.mxu0 0
    %1513 = vmatpush1.bf16.msra.mxu0 0
    %1514 = vmatprep.mubr.bf16.mxu0 0
    %1515 = vmatmul.mubr.bf16.gmra.mrb[0].mxu0 %v1427
    %v1516 = vpop.f32.mrb[0].mxu0
    %v1517 = vadd.f32 0.0, %v1516
    %v1518 = vpop.f32.mrb[0].mxu0
    %v1519 = vadd.f32 0.0, %v1518
    %v1520 = vpop.f32.mrb[0].mxu0
    %v1521 = vpop.f32.mrb[0].mxu0
    %1522 = vdwg.mxu0
    %v1524 = vsel %vm608, %v1310, 0
    %1526 = vmatprep.subr.bf16.mxu0 %v1315
    %1527 = vmatpush1.bf16.msra.mxu0 %v1314
    %1528 = vmatprep.subr.bf16.mxu0 %v1319
    %1529 = vmatpush1.bf16.msra.mxu0 %v1318
    %1530 = vmatprep.subr.bf16.mxu0 %v1323
    %1531 = vmatpush1.bf16.msra.mxu0 %v1322
    %1532 = vmatprep.subr.bf16.mxu0 %v1327
    %1533 = vmatpush1.bf16.msra.mxu0 %v1326
    %1534 = vmatprep.subr.bf16.mxu0 %v1433
    %1535 = vmatpush1.bf16.msra.mxu0 %v1430
    %1536 = vmatprep.subr.bf16.mxu0 0
    %1537 = vmatpush1.bf16.msra.mxu0 0
    %1538 = vmatprep.subr.bf16.mxu0 0
    %1539 = vmatpush1.bf16.msra.mxu0 0
    %1540 = vmatprep.subr.bf16.mxu0 0
    %1541 = vmatpush1.bf16.msra.mxu0 0
    %1542 = vmatprep.subr.bf16.mxu0 0
    %1543 = vmatpush1.bf16.msra.mxu0 0
    %1544 = vmatprep.subr.bf16.mxu0 0
    %1545 = vmatpush1.bf16.msra.mxu0 0
    %1546 = vmatprep.subr.bf16.mxu0 0
    %1547 = vmatpush1.bf16.msra.mxu0 0
    %1548 = vmatprep.subr.bf16.mxu0 0
    %1549 = vmatpush1.bf16.msra.mxu0 0
    %1550 = vmatprep.subr.bf16.mxu0 0
    %1551 = vmatpush1.bf16.msra.mxu0 0
    %1552 = vmatprep.subr.bf16.mxu0 0
    %1553 = vmatpush1.bf16.msra.mxu0 0
    %1554 = vmatprep.subr.bf16.mxu0 0
    %1555 = vmatpush1.bf16.msra.mxu0 0
    %1556 = vmatprep.subr.bf16.mxu0 0
    %1557 = vmatpush1.bf16.msra.mxu0 0
    %1558 = vmatprep.mubr.bf16.mxu0 0
    %1559 = vmatmul.mubr.bf16.gmra.mrb[0].mxu0 %v1524
    %v1560 = vpop.f32.mrb[0].mxu0
    %v1561 = vadd.f32 %v1476, %v1560
    %v1562 = vpop.f32.mrb[0].mxu0
    %v1563 = vadd.f32 %v1478, %v1562
    %v1564 = vpop.f32.mrb[0].mxu0
    %v1565 = vpop.f32.mrb[0].mxu0
    %1566 = vdwg.mxu0
    %1567 = vmatprep.subr.bf16.mxu0 %v1317
    %1568 = vmatpush1.bf16.msra.mxu0 %v1316
    %1569 = vmatprep.subr.bf16.mxu0 %v1321
    %1570 = vmatpush1.bf16.msra.mxu0 %v1320
    %1571 = vmatprep.subr.bf16.mxu0 %v1325
    %1572 = vmatpush1.bf16.msra.mxu0 %v1324
    %1573 = vmatprep.subr.bf16.mxu0 %v1329
    %1574 = vmatpush1.bf16.msra.mxu0 %v1328
    %1575 = vmatprep.subr.bf16.mxu0 %v1439
    %1576 = vmatpush1.bf16.msra.mxu0 %v1436
    %1577 = vmatprep.subr.bf16.mxu0 0
    %1578 = vmatpush1.bf16.msra.mxu0 0
    %1579 = vmatprep.subr.bf16.mxu0 0
    %1580 = vmatpush1.bf16.msra.mxu0 0
    %1581 = vmatprep.subr.bf16.mxu0 0
    %1582 = vmatpush1.bf16.msra.mxu0 0
    %1583 = vmatprep.subr.bf16.mxu0 0
    %1584 = vmatpush1.bf16.msra.mxu0 0
    %1585 = vmatprep.subr.bf16.mxu0 0
    %1586 = vmatpush1.bf16.msra.mxu0 0
    %1587 = vmatprep.subr.bf16.mxu0 0
    %1588 = vmatpush1.bf16.msra.mxu0 0
    %1589 = vmatprep.subr.bf16.mxu0 0
    %1590 = vmatpush1.bf16.msra.mxu0 0
    %1591 = vmatprep.subr.bf16.mxu0 0
    %1592 = vmatpush1.bf16.msra.mxu0 0
    %1593 = vmatprep.subr.bf16.mxu0 0
    %1594 = vmatpush1.bf16.msra.mxu0 0
    %1595 = vmatprep.subr.bf16.mxu0 0
    %1596 = vmatpush1.bf16.msra.mxu0 0
    %1597 = vmatprep.subr.bf16.mxu0 0
    %1598 = vmatpush1.bf16.msra.mxu0 0
    %1599 = vmatprep.mubr.bf16.mxu0 0
    %1600 = vmatmul.mubr.bf16.gmra.mrb[0].mxu0 %v1524
    %v1601 = vpop.f32.mrb[0].mxu0
    %v1602 = vadd.f32 %v1517, %v1601
    %v1603 = vpop.f32.mrb[0].mxu0
    %v1604 = vadd.f32 %v1519, %v1603
    %v1605 = vpop.f32.mrb[0].mxu0
    %v1606 = vpop.f32.mrb[0].mxu0
    %1607 = vdwg.mxu0
    %v1609 = vsel %vm612, %v1422, 0
    %v1612 = vsel %vm612, %v1423, 0
    %v1615 = vsel %vm612, %v1424, 0
    %v1618 = vsel %vm612, %v1425, 0
    %1620 = vmatprep.subr.bf16.mxu0 %v1407
    %1621 = vmatpush1.bf16.msra.mxu0 %v1406
    %1622 = vmatprep.subr.bf16.mxu0 %v1411
    %1623 = vmatpush1.bf16.msra.mxu0 %v1410
    %1624 = vmatprep.subr.bf16.mxu0 %v1415
    %1625 = vmatpush1.bf16.msra.mxu0 %v1414
    %1626 = vmatprep.subr.bf16.mxu0 %v1419
    %1627 = vmatpush1.bf16.msra.mxu0 %v1418
    %1628 = vmatprep.subr.bf16.mxu0 %v1612
    %1629 = vmatpush1.bf16.msra.mxu0 %v1609
    %1630 = vmatprep.subr.bf16.mxu0 0
    %1631 = vmatpush1.bf16.msra.mxu0 0
    %1632 = vmatprep.subr.bf16.mxu0 0
    %1633 = vmatpush1.bf16.msra.mxu0 0
    %1634 = vmatprep.subr.bf16.mxu0 0
    %1635 = vmatpush1.bf16.msra.mxu0 0
    %1636 = vmatprep.subr.bf16.mxu0 0
    %1637 = vmatpush1.bf16.msra.mxu0 0
    %1638 = vmatprep.subr.bf16.mxu0 0
    %1639 = vmatpush1.bf16.msra.mxu0 0
    %1640 = vmatprep.subr.bf16.mxu0 0
    %1641 = vmatpush1.bf16.msra.mxu0 0
    %1642 = vmatprep.subr.bf16.mxu0 0
    %1643 = vmatpush1.bf16.msra.mxu0 0
    %1644 = vmatprep.subr.bf16.mxu0 0
    %1645 = vmatpush1.bf16.msra.mxu0 0
    %1646 = vmatprep.subr.bf16.mxu0 0
    %1647 = vmatpush1.bf16.msra.mxu0 0
    %1648 = vmatprep.subr.bf16.mxu0 0
    %1649 = vmatpush1.bf16.msra.mxu0 0
    %1650 = vmatprep.subr.bf16.mxu0 0
    %1651 = vmatpush1.bf16.msra.mxu0 0
    %1652 = vmatprep.mubr.bf16.mxu0 0
    %1653 = vmatmul.mubr.bf16.gmra.mrb[0].mxu0 %v1524
    %v1654 = vpop.f32.mrb[0].mxu0
    %v1655 = vadd.f32 0.0, %v1654
    %v1656 = vpop.f32.mrb[0].mxu0
    %v1657 = vadd.f32 0.0, %v1656
    %v1658 = vpop.f32.mrb[0].mxu0
    %v1659 = vpop.f32.mrb[0].mxu0
    %1660 = vdwg.mxu0
    %1661 = vmatprep.subr.bf16.mxu0 %v1409
    %1662 = vmatpush1.bf16.msra.mxu0 %v1408
    %1663 = vmatprep.subr.bf16.mxu0 %v1413
    %1664 = vmatpush1.bf16.msra.mxu0 %v1412
    %1665 = vmatprep.subr.bf16.mxu0 %v1417
    %1666 = vmatpush1.bf16.msra.mxu0 %v1416
    %1667 = vmatprep.subr.bf16.mxu0 %v1421
    %1668 = vmatpush1.bf16.msra.mxu0 %v1420
    %1669 = vmatprep.subr.bf16.mxu0 %v1618
    %1670 = vmatpush1.bf16.msra.mxu0 %v1615
    %1671 = vmatprep.subr.bf16.mxu0 0
    %1672 = vmatpush1.bf16.msra.mxu0 0
    %1673 = vmatprep.subr.bf16.mxu0 0
    %1674 = vmatpush1.bf16.msra.mxu0 0
    %1675 = vmatprep.subr.bf16.mxu0 0
    %1676 = vmatpush1.bf16.msra.mxu0 0
    %1677 = vmatprep.subr.bf16.mxu0 0
    %1678 = vmatpush1.bf16.msra.mxu0 0
    %1679 = vmatprep.subr.bf16.mxu0 0
    %1680 = vmatpush1.bf16.msra.mxu0 0
    %1681 = vmatprep.subr.bf16.mxu0 0
    %1682 = vmatpush1.bf16.msra.mxu0 0
    %1683 = vmatprep.subr.bf16.mxu0 0
    %1684 = vmatpush1.bf16.msra.mxu0 0
    %1685 = vmatprep.subr.bf16.mxu0 0
    %1686 = vmatpush1.bf16.msra.mxu0 0
    %1687 = vmatprep.subr.bf16.mxu0 0
    %1688 = vmatpush1.bf16.msra.mxu0 0
    %1689 = vmatprep.subr.bf16.mxu0 0
    %1690 = vmatpush1.bf16.msra.mxu0 0
    %1691 = vmatprep.subr.bf16.mxu0 0
    %1692 = vmatpush1.bf16.msra.mxu0 0
    %1693 = vmatprep.mubr.bf16.mxu0 0
    %1694 = vmatmul.mubr.bf16.gmra.mrb[0].mxu0 %v1524
    %v1695 = vpop.f32.mrb[0].mxu0
    %v1696 = vadd.f32 0.0, %v1695
    %v1697 = vpop.f32.mrb[0].mxu0
    %v1698 = vadd.f32 0.0, %v1697
    %v1699 = vpop.f32.mrb[0].mxu0
    %v1700 = vpop.f32.mrb[0].mxu0
    %1701 = vdwg.mxu0
    %v1702 = vadd.f32 %v1561, %v1655
    %v1703 = vadd.f32 %v1563, %v1657
    %v1704 = vadd.f32 %v1602, %v1696
    %v1705 = vadd.f32 %v1604, %v1698
    %v1706 = vld [vmem:[%s5] sm:$0xf]
    %1708 = vset.pattern.permute.xlu0 0
    %1709 = vperm.xlu0 %1708, %v1706
    %v1710 = vpop.permute.xlu0 %1709
    %v1712 = vadd.f32 %v1702, %v1710
    %v1713 = vadd.f32 %v1703, %v1710
    %v1714 = vadd.f32 %v1704, %v1710
    %v1715 = vadd.f32 %v1705, %v1710
    %v1716 = vld [vmem:[%s0] sm:$0xff]
    %v1718 = vcombine.high %v1716, %v1716
    %v1720 = vadd.f32 %v1712, %v1716
    %v1721 = vadd.f32 %v1713, %v1718
    %v1724 = vcombine.low %v1720, %v1721
    %1726 = vst [vmem:[#allocation6] sm:$0xff] %v1724
    %v1727 = vld [vmem:[%s64] sm:$0xff]
    %v1729 = vcombine.high %v1727, %v1727
    %v1731 = vadd.f32 %v1714, %v1727
    %v1732 = vadd.f32 %v1715, %v1729
    %v1735 = vcombine.low %v1731, %v1732
    %1737 = vst [vmem:[#allocation6 + $0x8] sm:$0xff] %v1735
    // Predicated region
    $region34: #{tpu_custom_call.1} parent=1 // pred_check
      _
    $region35: #{tpu_custom_call.1} parent=1 // pred_check_branch
      %1739 = sbr.rel (0) target = $region37
    $region36: #{tpu_custom_call.1} parent=1 // pred_region
      %s1741 = ssub.s32 256, 256
      %1742 = vsyncadd [#allocation7], %s1741
      %s1744 = sshll.u32 [#allocation6], 4
      %s1745 = int_to_ptr.vmem [resolvable:$true] %s1744
      %1747 = dma.vmem_to_hbm [thread:$0]  %s1745, 256, %s8, [#allocation7]
    $region37: #{tpu_custom_call.1} parent=1 // pred_fallthru
      _
    // Predicated region
    $region38: #{tpu_custom_call.1} parent=1 // pred_check
      _
    $region39: #{tpu_custom_call.1} parent=1 // pred_check_branch
      %1749 = sbr.rel (0) target = $region41
    $region40: #{tpu_custom_call.1} parent=1 // pred_region
      %1750 = dma.done [#allocation7], 256
    $region41: #{tpu_custom_call.1} parent=1 // pred_fallthru
      _
    %1751 = vsyncpa [#allocation7], 1

</llo_original>
